<compile_context>
chip_gen: v7x
topology: tpu7x:2x2x1
jax: 0.10.0
libtpu: 0.0.40
codegen_flags: <defaults>
</compile_context>

<pallas_src>
import jax
import jax.numpy as jnp
import numpy as np
from jax.experimental import pallas as pl
from jax.experimental.pallas import tpu as pltpu


def _fcn_kernel(x_ref, w1a_ref, b1a_ref, w1bx_ref, w1br_ref, b1b_ref,
                w2_ref, b2_ref, wo_ref, bo_ref, out_ref):
    # out_ref block: (max_steps, B, odim) for the current conv group.
    max_steps, B, odim = out_ref.shape
    hdim = w2_ref.shape[0]

    x = x_ref[...]
    w2 = w2_ref[...]
    wo = wo_ref[...]
    # Hoisted bias broadcasts (used every unrolled step).
    b2 = jnp.broadcast_to(b2_ref[...], (B, hdim))
    bo = jnp.broadcast_to(bo_ref[...], (B, odim))

    def layer2_and_out(h1):
        h2 = jnp.maximum(
            jnp.dot(h1, w2, preferred_element_type=jnp.float32) + b2, 0.0)
        o = jnp.dot(h2, wo, preferred_element_type=jnp.float32) + bo
        return h2, o

    # ---- step 0: hidden = relu(Linear11(input))  (Linear11 shared by groups)
    h1 = jnp.maximum(
        jnp.dot(x, w1a_ref[...], preferred_element_type=jnp.float32)
        + jnp.broadcast_to(b1a_ref[...], (B, hdim)), 0.0)
    h, o = layer2_and_out(h1)          # h is the POST-Linear2 hidden (carry)
    out_ref[0, :, :] = o

    # x @ W1b[:din] + b1b does not depend on the step -> compute once.
    xw1b = (jnp.dot(x, w1bx_ref[...], preferred_element_type=jnp.float32)
            + jnp.broadcast_to(b1b_ref[...], (B, hdim)))
    w1br = w1br_ref[...]               # (hdim + odim, hdim)

    # ---- steps 1..max_steps-1 (fully unrolled; bodies are a few vregs each).
    for i in range(1, max_steps):
        ho = jnp.concatenate([h, o], axis=1)          # cat(hidden, output)
        h1 = jnp.maximum(
            xw1b + jnp.dot(ho, w1br, preferred_element_type=jnp.float32), 0.0)
        h, o = layer2_and_out(h1)
        out_ref[i, :, :] = o


def fcn_pallas_forward(x, w1a, b1a, group_params, conv_list, out_seq_length):
    """Runs every conv group's recurrent decode in one pallas_call.

    group_params: list of (w1b, b1b, w2, b2, wo, bo) per group.
    Returns (sum_k steps_k, B, output_dim), matching torch.cat(output_list, 0).
    """
    B, din = x.shape
    hdim = w1a.shape[1]
    num_groups = len(conv_list)
    steps_list = [out_seq_length // c for c in conv_list]
    max_steps = max(steps_list)

    # Stack per-group weights along a leading group axis; split W1b into its
    # x-part (hoisted inside the kernel) and its recurrent part.
    w1bx = jnp.stack([g[0][:din] for g in group_params])          # (G, din, H)
    w1br = jnp.stack([g[0][din:] for g in group_params])          # (G, H+O, H)
    b1b = jnp.stack([g[1] for g in group_params])                 # (G, 1, H)
    w2 = jnp.stack([g[2] for g in group_params])                  # (G, H, H)
    b2 = jnp.stack([g[3] for g in group_params])                  # (G, 1, H)
    wo = jnp.stack([g[4] for g in group_params])                  # (G, H, O)
    bo = jnp.stack([g[5] for g in group_params])                  # (G, 1, O)
    odim = wo.shape[-1]

    def shared(shape):
        return pl.BlockSpec(shape, lambda g: tuple(0 for _ in shape))

    def per_group(shape):  # leading group dim squeezed out of the kernel view
        return pl.BlockSpec((None,) + shape, lambda g: (g,) + tuple(0 for _ in shape))

    grid_spec = pltpu.PrefetchScalarGridSpec(
        num_scalar_prefetch=0,
        grid=(num_groups,),
        in_specs=[
            shared((B, din)),                     # input (constant across groups)
            shared((din, hdim)), shared((1, hdim)),       # Linear 11 (shared)
            per_group((din, hdim)),                       # W1b[:din]
            per_group((hdim + odim, hdim)),               # W1b[din:]
            per_group((1, hdim)),                         # b1b
            per_group((hdim, hdim)), per_group((1, hdim)),  # Linear 2_k
            per_group((hdim, odim)), per_group((1, odim)),  # output layer k
        ],
        out_specs=pl.BlockSpec((None, max_steps, B, odim),
                               lambda g: (g, 0, 0, 0)),
    )

    out = pl.pallas_call(
        _fcn_kernel,
        out_shape=jax.ShapeDtypeStruct((num_groups, max_steps, B, odim),
                                       jnp.float32),
        grid_spec=grid_spec,
        compiler_params=pltpu.CompilerParams(
            dimension_semantics=("parallel",)),  # groups shard across v7x TCs
    )(x, w1a, b1a, w1bx, w1br, b1b, w2, b2, wo, bo)

    # Every group runs max_steps (extra steps are negligible compute); the
    # wrapper keeps only the valid steps_k per group and concatenates along
    # axis 0, exactly like torch.cat(output_list, 0).
    pieces = [out[k, :steps_list[k]] for k in range(num_groups)]
    return jnp.concatenate(pieces, axis=0)


def init_fcn_params(key, input_dim, hidden_dim, output_dim,
                    in_seq_length, out_seq_length, conv_list):
    din = input_dim * in_seq_length

    def linear(k, fan_in, fan_out):
        kw, kb = jax.random.split(k)
        bound = 1.0 / float(np.sqrt(fan_in))
        w = jax.random.uniform(kw, (fan_in, fan_out), jnp.float32, -bound, bound)
        b = jax.random.uniform(kb, (1, fan_out), jnp.float32, -bound, bound)
        return w, b

    keys = jax.random.split(key, 1 + 3 * len(conv_list))
    params = {}
    # hidden_layer11 is a single Linear shared by every conv group.
    params['w1a'], params['b1a'] = linear(keys[0], din, hidden_dim)
    params['groups'] = []
    for k in range(len(conv_list)):
        w1b, b1b = linear(keys[1 + 3 * k], din + hidden_dim + output_dim, hidden_dim)
        w2, b2 = linear(keys[2 + 3 * k], hidden_dim, hidden_dim)
        wo, bo = linear(keys[3 + 3 * k], hidden_dim, output_dim)
        params['groups'].append((w1b, b1b, w2, b2, wo, bo))
    return params


def fcn_forward(params, x, target, conv_list, out_seq_length, is_training=False):
    # `target` is unused by FCN.forward; the is_training branch only changes
    # where `output` is read back from, which is numerically identical.
    del target, is_training
    return fcn_pallas_forward(x, params['w1a'], params['b1a'],
                              params['groups'], conv_list, out_seq_length)


def fcn_reference(params, x, conv_list, out_seq_length):
    # Pure-JAX reference matching the PyTorch forward exactly.
    outs = []
    for k in range(len(conv_list)):
        steps = out_seq_length // conv_list[k]
        w1b, b1b, w2, b2, wo, bo = params['groups'][k]
        nci = x
        group = []
        for i in range(steps):
            if i == 0:
                h = jax.nn.relu(nci @ params['w1a'] + params['b1a'])
            else:
                h = jax.nn.relu(nci @ w1b + b1b)
            h = jax.nn.relu(h @ w2 + b2)           # hidden re-bound post-Linear2
            o = h @ wo + bo
            group.append(o)
            nci = jnp.concatenate([x, h, o], axis=1)
        outs.append(jnp.stack(group, axis=0))
    return jnp.concatenate(outs, axis=0)


if __name__ == "__main__":
    input_dim, hidden_dim, output_dim = 4, 32, 4
    in_seq_length, out_seq_length = 8, 8
    conv_list = [1, 2]
    B = 2

    key = jax.random.PRNGKey(0)
    kp, kx, kt = jax.random.split(key, 3)
    params = init_fcn_params(kp, input_dim, hidden_dim, output_dim,
                             in_seq_length, out_seq_length, conv_list)
    x = jax.random.normal(kx, (B, input_dim * in_seq_length), jnp.float32)
    target = jax.random.normal(kt, (out_seq_length, B, output_dim), jnp.float32)

    out = fcn_forward(params, x, target, conv_list, out_seq_length)
    out = jax.block_until_ready(out)

    expected_steps = sum(out_seq_length // c for c in conv_list)
    assert out.shape == (expected_steps, B, output_dim), out.shape

    ref = fcn_reference(params, x, conv_list, out_seq_length)
    np.testing.assert_allclose(np.asarray(out), np.asarray(ref), rtol=1e-4, atol=1e-4)

    print("KERNEL_OK")
</pallas_src>

<mosaic_0001>
module attributes {stable_mosaic.version = 11 : i64} {
  func.func @_fcn_kernel(%arg0: i32, %arg1: memref<2x32xf32, #tpu.memory_space<vmem>>, %arg2: memref<32x32xf32, #tpu.memory_space<vmem>>, %arg3: memref<1x32xf32, #tpu.memory_space<vmem>>, %arg4: memref<1x32x32xf32, #tpu.memory_space<vmem>>, %arg5: memref<1x36x32xf32, #tpu.memory_space<vmem>>, %arg6: memref<1x1x32xf32, #tpu.memory_space<vmem>>, %arg7: memref<1x32x32xf32, #tpu.memory_space<vmem>>, %arg8: memref<1x1x32xf32, #tpu.memory_space<vmem>>, %arg9: memref<1x32x4xf32, #tpu.memory_space<vmem>>, %arg10: memref<1x1x4xf32, #tpu.memory_space<vmem>>, %arg11: memref<1x8x2x4xf32, #tpu.memory_space<vmem>>) attributes {dimension_semantics = [#tpu.dimension_semantics<parallel>], iteration_bounds = array<i64: 2>, scalar_prefetch = 0 : i64, scratch_operands = 0 : i64, tpu.core_type = #tpu.core_type<tc>, window_params = [{pipeline_mode = #tpu.pipeline_mode<synchronous>, transform_indices = @transform_0, window_bounds = array<i64: 2, 32>}, {pipeline_mode = #tpu.pipeline_mode<synchronous>, transform_indices = @transform_1, window_bounds = array<i64: 32, 32>}, {pipeline_mode = #tpu.pipeline_mode<synchronous>, transform_indices = @transform_2, window_bounds = array<i64: 1, 32>}, {transform_indices = @transform_3, window_bounds = array<i64: 1, 32, 32>}, {transform_indices = @transform_4, window_bounds = array<i64: 1, 36, 32>}, {transform_indices = @transform_5, window_bounds = array<i64: 1, 1, 32>}, {transform_indices = @transform_6, window_bounds = array<i64: 1, 32, 32>}, {transform_indices = @transform_7, window_bounds = array<i64: 1, 1, 32>}, {transform_indices = @transform_8, window_bounds = array<i64: 1, 32, 4>}, {transform_indices = @transform_9, window_bounds = array<i64: 1, 1, 4>}, {transform_indices = @transform_10, window_bounds = array<i64: 1, 8, 2, 4>}]} {
    %c0 = arith.constant 0 : index
    %c0_0 = arith.constant 0 : index
    %0 = vector.load %arg1[%c0, %c0_0] : memref<2x32xf32, #tpu.memory_space<vmem>>, vector<2x32xf32>
    %c0_1 = arith.constant 0 : index
    %c0_2 = arith.constant 0 : index
    %c0_3 = arith.constant 0 : index
    %1 = vector.load %arg7[%c0_1, %c0_2, %c0_3] : memref<1x32x32xf32, #tpu.memory_space<vmem>>, vector<1x32x32xf32>
    %2 = vector.shape_cast %1 : vector<1x32x32xf32> to vector<32x32xf32>
    %c0_4 = arith.constant 0 : index
    %c0_5 = arith.constant 0 : index
    %c0_6 = arith.constant 0 : index
    %3 = vector.load %arg9[%c0_4, %c0_5, %c0_6] : memref<1x32x4xf32, #tpu.memory_space<vmem>>, vector<1x32x4xf32>
    %4 = vector.shape_cast %3 : vector<1x32x4xf32> to vector<32x4xf32>
    %c0_7 = arith.constant 0 : index
    %c0_8 = arith.constant 0 : index
    %c0_9 = arith.constant 0 : index
    %5 = vector.load %arg8[%c0_7, %c0_8, %c0_9] : memref<1x1x32xf32, #tpu.memory_space<vmem>>, vector<1x1x32xf32>
    %6 = vector.shape_cast %5 : vector<1x1x32xf32> to vector<1x32xf32>
    %7 = vector.shape_cast %6 : vector<1x32xf32> to vector<1x32xf32>
    %8 = vector.broadcast %7 : vector<1x32xf32> to vector<2x32xf32>
    %c0_10 = arith.constant 0 : index
    %c0_11 = arith.constant 0 : index
    %c0_12 = arith.constant 0 : index
    %9 = vector.load %arg10[%c0_10, %c0_11, %c0_12] : memref<1x1x4xf32, #tpu.memory_space<vmem>>, vector<1x1x4xf32>
    %10 = vector.shape_cast %9 : vector<1x1x4xf32> to vector<1x4xf32>
    %11 = vector.shape_cast %10 : vector<1x4xf32> to vector<1x4xf32>
    %12 = vector.broadcast %11 : vector<1x4xf32> to vector<2x4xf32>
    %c0_13 = arith.constant 0 : index
    %c0_14 = arith.constant 0 : index
    %13 = vector.load %arg2[%c0_13, %c0_14] : memref<32x32xf32, #tpu.memory_space<vmem>>, vector<32x32xf32>
    %cst = arith.constant dense<0.000000e+00> : vector<2x32xf32>
    %14 = tpu.matmul %0, %13, %cst {dimension_numbers = #tpu.dot_dimension_numbers<[1], [0], [0], [1], [0, 0, 1, 1], [], []>} : vector<2x32xf32>, vector<32x32xf32>, vector<2x32xf32> -> vector<2x32xf32>
    %c0_15 = arith.constant 0 : index
    %c0_16 = arith.constant 0 : index
    %15 = vector.load %arg3[%c0_15, %c0_16] : memref<1x32xf32, #tpu.memory_space<vmem>>, vector<1x32xf32>
    %16 = vector.shape_cast %15 : vector<1x32xf32> to vector<1x32xf32>
    %17 = vector.broadcast %16 : vector<1x32xf32> to vector<2x32xf32>
    %18 = arith.addf %14, %17 : vector<2x32xf32>
    %cst_17 = arith.constant 0.000000e+00 : f32
    %19 = vector.broadcast %cst_17 : f32 to vector<2x32xf32>
    %20 = arith.maximumf %18, %19 : vector<2x32xf32>
    %cst_18 = arith.constant dense<0.000000e+00> : vector<2x32xf32>
    %21 = tpu.matmul %20, %2, %cst_18 {dimension_numbers = #tpu.dot_dimension_numbers<[1], [0], [0], [1], [0, 0, 1, 1], [], []>} : vector<2x32xf32>, vector<32x32xf32>, vector<2x32xf32> -> vector<2x32xf32>
    %22 = arith.addf %21, %8 : vector<2x32xf32>
    %cst_19 = arith.constant 0.000000e+00 : f32
    %23 = vector.broadcast %cst_19 : f32 to vector<2x32xf32>
    %24 = arith.maximumf %22, %23 : vector<2x32xf32>
    %cst_20 = arith.constant dense<0.000000e+00> : vector<2x4xf32>
    %25 = tpu.matmul %24, %4, %cst_20 {dimension_numbers = #tpu.dot_dimension_numbers<[1], [0], [0], [1], [0, 0, 1, 1], [], []>} : vector<2x32xf32>, vector<32x4xf32>, vector<2x4xf32> -> vector<2x4xf32>
    %26 = arith.addf %25, %12 : vector<2x4xf32>
    %c0_21 = arith.constant 0 : index
    %c0_22 = arith.constant 0 : index
    %c0_23 = arith.constant 0 : index
    %c0_24 = arith.constant 0 : index
    %27 = vector.load %arg11[%c0_21, %c0_22, %c0_23, %c0_24] : memref<1x8x2x4xf32, #tpu.memory_space<vmem>>, vector<1x1x2x4xf32>
    %28 = vector.shape_cast %27 : vector<1x1x2x4xf32> to vector<2x4xf32>
    %29 = vector.shape_cast %26 : vector<2x4xf32> to vector<1x1x2x4xf32>
    tpu.vector_store %arg11[%c0_21, %c0_22, %c0_23, %c0_24], %29 {strides = array<i32>} : memref<1x8x2x4xf32, #tpu.memory_space<vmem>>, vector<1x1x2x4xf32>,
    %c0_25 = arith.constant 0 : index
    %c0_26 = arith.constant 0 : index
    %c0_27 = arith.constant 0 : index
    %30 = vector.load %arg4[%c0_25, %c0_26, %c0_27] : memref<1x32x32xf32, #tpu.memory_space<vmem>>, vector<1x32x32xf32>
    %31 = vector.shape_cast %30 : vector<1x32x32xf32> to vector<32x32xf32>
    %cst_28 = arith.constant dense<0.000000e+00> : vector<2x32xf32>
    %32 = tpu.matmul %0, %31, %cst_28 {dimension_numbers = #tpu.dot_dimension_numbers<[1], [0], [0], [1], [0, 0, 1, 1], [], []>} : vector<2x32xf32>, vector<32x32xf32>, vector<2x32xf32> -> vector<2x32xf32>
    %c0_29 = arith.constant 0 : index
    %c0_30 = arith.constant 0 : index
    %c0_31 = arith.constant 0 : index
    %33 = vector.load %arg6[%c0_29, %c0_30, %c0_31] : memref<1x1x32xf32, #tpu.memory_space<vmem>>, vector<1x1x32xf32>
    %34 = vector.shape_cast %33 : vector<1x1x32xf32> to vector<1x32xf32>
    %35 = vector.shape_cast %34 : vector<1x32xf32> to vector<1x32xf32>
    %36 = vector.broadcast %35 : vector<1x32xf32> to vector<2x32xf32>
    %37 = arith.addf %32, %36 : vector<2x32xf32>
    %c0_32 = arith.constant 0 : index
    %c0_33 = arith.constant 0 : index
    %c0_34 = arith.constant 0 : index
    %38 = vector.load %arg5[%c0_32, %c0_33, %c0_34] : memref<1x36x32xf32, #tpu.memory_space<vmem>>, vector<1x36x32xf32>
    %39 = vector.shape_cast %38 : vector<1x36x32xf32> to vector<36x32xf32>
    %40 = tpu.concatenate %24, %26 in 1 : vector<2x32xf32>, vector<2x4xf32> -> vector<2x36xf32>
    %cst_35 = arith.constant dense<0.000000e+00> : vector<2x32xf32>
    %41 = tpu.matmul %40, %39, %cst_35 {dimension_numbers = #tpu.dot_dimension_numbers<[1], [0], [0], [1], [0, 0, 1, 1], [], []>} : vector<2x36xf32>, vector<36x32xf32>, vector<2x32xf32> -> vector<2x32xf32>
    %42 = arith.addf %37, %41 : vector<2x32xf32>
    %cst_36 = arith.constant 0.000000e+00 : f32
    %43 = vector.broadcast %cst_36 : f32 to vector<2x32xf32>
    %44 = arith.maximumf %42, %43 : vector<2x32xf32>
    %cst_37 = arith.constant dense<0.000000e+00> : vector<2x32xf32>
    %45 = tpu.matmul %44, %2, %cst_37 {dimension_numbers = #tpu.dot_dimension_numbers<[1], [0], [0], [1], [0, 0, 1, 1], [], []>} : vector<2x32xf32>, vector<32x32xf32>, vector<2x32xf32> -> vector<2x32xf32>
    %46 = arith.addf %45, %8 : vector<2x32xf32>
    %cst_38 = arith.constant 0.000000e+00 : f32
    %47 = vector.broadcast %cst_38 : f32 to vector<2x32xf32>
    %48 = arith.maximumf %46, %47 : vector<2x32xf32>
    %cst_39 = arith.constant dense<0.000000e+00> : vector<2x4xf32>
    %49 = tpu.matmul %48, %4, %cst_39 {dimension_numbers = #tpu.dot_dimension_numbers<[1], [0], [0], [1], [0, 0, 1, 1], [], []>} : vector<2x32xf32>, vector<32x4xf32>, vector<2x4xf32> -> vector<2x4xf32>
    %50 = arith.addf %49, %12 : vector<2x4xf32>
    %c0_40 = arith.constant 0 : index
    %c1 = arith.constant 1 : index
    %c0_41 = arith.constant 0 : index
    %c0_42 = arith.constant 0 : index
    %51 = vector.load %arg11[%c0_40, %c1, %c0_41, %c0_42] : memref<1x8x2x4xf32, #tpu.memory_space<vmem>>, vector<1x1x2x4xf32>
    %52 = vector.shape_cast %51 : vector<1x1x2x4xf32> to vector<2x4xf32>
    %53 = vector.shape_cast %50 : vector<2x4xf32> to vector<1x1x2x4xf32>
    tpu.vector_store %arg11[%c0_40, %c1, %c0_41, %c0_42], %53 {strides = array<i32>} : memref<1x8x2x4xf32, #tpu.memory_space<vmem>>, vector<1x1x2x4xf32>,
    %54 = tpu.concatenate %48, %50 in 1 : vector<2x32xf32>, vector<2x4xf32> -> vector<2x36xf32>
    %cst_43 = arith.constant dense<0.000000e+00> : vector<2x32xf32>
    %55 = tpu.matmul %54, %39, %cst_43 {dimension_numbers = #tpu.dot_dimension_numbers<[1], [0], [0], [1], [0, 0, 1, 1], [], []>} : vector<2x36xf32>, vector<36x32xf32>, vector<2x32xf32> -> vector<2x32xf32>
    %56 = arith.addf %37, %55 : vector<2x32xf32>
    %cst_44 = arith.constant 0.000000e+00 : f32
    %57 = vector.broadcast %cst_44 : f32 to vector<2x32xf32>
    %58 = arith.maximumf %56, %57 : vector<2x32xf32>
    %cst_45 = arith.constant dense<0.000000e+00> : vector<2x32xf32>
    %59 = tpu.matmul %58, %2, %cst_45 {dimension_numbers = #tpu.dot_dimension_numbers<[1], [0], [0], [1], [0, 0, 1, 1], [], []>} : vector<2x32xf32>, vector<32x32xf32>, vector<2x32xf32> -> vector<2x32xf32>
    %60 = arith.addf %59, %8 : vector<2x32xf32>
    %cst_46 = arith.constant 0.000000e+00 : f32
    %61 = vector.broadcast %cst_46 : f32 to vector<2x32xf32>
    %62 = arith.maximumf %60, %61 : vector<2x32xf32>
    %cst_47 = arith.constant dense<0.000000e+00> : vector<2x4xf32>
    %63 = tpu.matmul %62, %4, %cst_47 {dimension_numbers = #tpu.dot_dimension_numbers<[1], [0], [0], [1], [0, 0, 1, 1], [], []>} : vector<2x32xf32>, vector<32x4xf32>, vector<2x4xf32> -> vector<2x4xf32>
    %64 = arith.addf %63, %12 : vector<2x4xf32>
    %c0_48 = arith.constant 0 : index
    %c2 = arith.constant 2 : index
    %c0_49 = arith.constant 0 : index
    %c0_50 = arith.constant 0 : index
    %65 = vector.load %arg11[%c0_48, %c2, %c0_49, %c0_50] : memref<1x8x2x4xf32, #tpu.memory_space<vmem>>, vector<1x1x2x4xf32>
    %66 = vector.shape_cast %65 : vector<1x1x2x4xf32> to vector<2x4xf32>
    %67 = vector.shape_cast %64 : vector<2x4xf32> to vector<1x1x2x4xf32>
    tpu.vector_store %arg11[%c0_48, %c2, %c0_49, %c0_50], %67 {strides = array<i32>} : memref<1x8x2x4xf32, #tpu.memory_space<vmem>>, vector<1x1x2x4xf32>,
    %68 = tpu.concatenate %62, %64 in 1 : vector<2x32xf32>, vector<2x4xf32> -> vector<2x36xf32>
    %cst_51 = arith.constant dense<0.000000e+00> : vector<2x32xf32>
    %69 = tpu.matmul %68, %39, %cst_51 {dimension_numbers = #tpu.dot_dimension_numbers<[1], [0], [0], [1], [0, 0, 1, 1], [], []>} : vector<2x36xf32>, vector<36x32xf32>, vector<2x32xf32> -> vector<2x32xf32>
    %70 = arith.addf %37, %69 : vector<2x32xf32>
    %cst_52 = arith.constant 0.000000e+00 : f32
    %71 = vector.broadcast %cst_52 : f32 to vector<2x32xf32>
    %72 = arith.maximumf %70, %71 : vector<2x32xf32>
    %cst_53 = arith.constant dense<0.000000e+00> : vector<2x32xf32>
    %73 = tpu.matmul %72, %2, %cst_53 {dimension_numbers = #tpu.dot_dimension_numbers<[1], [0], [0], [1], [0, 0, 1, 1], [], []>} : vector<2x32xf32>, vector<32x32xf32>, vector<2x32xf32> -> vector<2x32xf32>
    %74 = arith.addf %73, %8 : vector<2x32xf32>
    %cst_54 = arith.constant 0.000000e+00 : f32
    %75 = vector.broadcast %cst_54 : f32 to vector<2x32xf32>
    %76 = arith.maximumf %74, %75 : vector<2x32xf32>
    %cst_55 = arith.constant dense<0.000000e+00> : vector<2x4xf32>
    %77 = tpu.matmul %76, %4, %cst_55 {dimension_numbers = #tpu.dot_dimension_numbers<[1], [0], [0], [1], [0, 0, 1, 1], [], []>} : vector<2x32xf32>, vector<32x4xf32>, vector<2x4xf32> -> vector<2x4xf32>
    %78 = arith.addf %77, %12 : vector<2x4xf32>
    %c0_56 = arith.constant 0 : index
    %c3 = arith.constant 3 : index
    %c0_57 = arith.constant 0 : index
    %c0_58 = arith.constant 0 : index
    %79 = vector.load %arg11[%c0_56, %c3, %c0_57, %c0_58] : memref<1x8x2x4xf32, #tpu.memory_space<vmem>>, vector<1x1x2x4xf32>
    %80 = vector.shape_cast %79 : vector<1x1x2x4xf32> to vector<2x4xf32>
    %81 = vector.shape_cast %78 : vector<2x4xf32> to vector<1x1x2x4xf32>
    tpu.vector_store %arg11[%c0_56, %c3, %c0_57, %c0_58], %81 {strides = array<i32>} : memref<1x8x2x4xf32, #tpu.memory_space<vmem>>, vector<1x1x2x4xf32>,
    %82 = tpu.concatenate %76, %78 in 1 : vector<2x32xf32>, vector<2x4xf32> -> vector<2x36xf32>
    %cst_59 = arith.constant dense<0.000000e+00> : vector<2x32xf32>
    %83 = tpu.matmul %82, %39, %cst_59 {dimension_numbers = #tpu.dot_dimension_numbers<[1], [0], [0], [1], [0, 0, 1, 1], [], []>} : vector<2x36xf32>, vector<36x32xf32>, vector<2x32xf32> -> vector<2x32xf32>
    %84 = arith.addf %37, %83 : vector<2x32xf32>
    %cst_60 = arith.constant 0.000000e+00 : f32
    %85 = vector.broadcast %cst_60 : f32 to vector<2x32xf32>
    %86 = arith.maximumf %84, %85 : vector<2x32xf32>
    %cst_61 = arith.constant dense<0.000000e+00> : vector<2x32xf32>
    %87 = tpu.matmul %86, %2, %cst_61 {dimension_numbers = #tpu.dot_dimension_numbers<[1], [0], [0], [1], [0, 0, 1, 1], [], []>} : vector<2x32xf32>, vector<32x32xf32>, vector<2x32xf32> -> vector<2x32xf32>
    %88 = arith.addf %87, %8 : vector<2x32xf32>
    %cst_62 = arith.constant 0.000000e+00 : f32
    %89 = vector.broadcast %cst_62 : f32 to vector<2x32xf32>
    %90 = arith.maximumf %88, %89 : vector<2x32xf32>
    %cst_63 = arith.constant dense<0.000000e+00> : vector<2x4xf32>
    %91 = tpu.matmul %90, %4, %cst_63 {dimension_numbers = #tpu.dot_dimension_numbers<[1], [0], [0], [1], [0, 0, 1, 1], [], []>} : vector<2x32xf32>, vector<32x4xf32>, vector<2x4xf32> -> vector<2x4xf32>
    %92 = arith.addf %91, %12 : vector<2x4xf32>
    %c0_64 = arith.constant 0 : index
    %c4 = arith.constant 4 : index
    %c0_65 = arith.constant 0 : index
    %c0_66 = arith.constant 0 : index
    %93 = vector.load %arg11[%c0_64, %c4, %c0_65, %c0_66] : memref<1x8x2x4xf32, #tpu.memory_space<vmem>>, vector<1x1x2x4xf32>
    %94 = vector.shape_cast %93 : vector<1x1x2x4xf32> to vector<2x4xf32>
    %95 = vector.shape_cast %92 : vector<2x4xf32> to vector<1x1x2x4xf32>
    tpu.vector_store %arg11[%c0_64, %c4, %c0_65, %c0_66], %95 {strides = array<i32>} : memref<1x8x2x4xf32, #tpu.memory_space<vmem>>, vector<1x1x2x4xf32>,
    %96 = tpu.concatenate %90, %92 in 1 : vector<2x32xf32>, vector<2x4xf32> -> vector<2x36xf32>
    %cst_67 = arith.constant dense<0.000000e+00> : vector<2x32xf32>
    %97 = tpu.matmul %96, %39, %cst_67 {dimension_numbers = #tpu.dot_dimension_numbers<[1], [0], [0], [1], [0, 0, 1, 1], [], []>} : vector<2x36xf32>, vector<36x32xf32>, vector<2x32xf32> -> vector<2x32xf32>
    %98 = arith.addf %37, %97 : vector<2x32xf32>
    %cst_68 = arith.constant 0.000000e+00 : f32
    %99 = vector.broadcast %cst_68 : f32 to vector<2x32xf32>
    %100 = arith.maximumf %98, %99 : vector<2x32xf32>
    %cst_69 = arith.constant dense<0.000000e+00> : vector<2x32xf32>
    %101 = tpu.matmul %100, %2, %cst_69 {dimension_numbers = #tpu.dot_dimension_numbers<[1], [0], [0], [1], [0, 0, 1, 1], [], []>} : vector<2x32xf32>, vector<32x32xf32>, vector<2x32xf32> -> vector<2x32xf32>
    %102 = arith.addf %101, %8 : vector<2x32xf32>
    %cst_70 = arith.constant 0.000000e+00 : f32
    %103 = vector.broadcast %cst_70 : f32 to vector<2x32xf32>
    %104 = arith.maximumf %102, %103 : vector<2x32xf32>
    %cst_71 = arith.constant dense<0.000000e+00> : vector<2x4xf32>
    %105 = tpu.matmul %104, %4, %cst_71 {dimension_numbers = #tpu.dot_dimension_numbers<[1], [0], [0], [1], [0, 0, 1, 1], [], []>} : vector<2x32xf32>, vector<32x4xf32>, vector<2x4xf32> -> vector<2x4xf32>
    %106 = arith.addf %105, %12 : vector<2x4xf32>
    %c0_72 = arith.constant 0 : index
    %c5 = arith.constant 5 : index
    %c0_73 = arith.constant 0 : index
    %c0_74 = arith.constant 0 : index
    %107 = vector.load %arg11[%c0_72, %c5, %c0_73, %c0_74] : memref<1x8x2x4xf32, #tpu.memory_space<vmem>>, vector<1x1x2x4xf32>
    %108 = vector.shape_cast %107 : vector<1x1x2x4xf32> to vector<2x4xf32>
    %109 = vector.shape_cast %106 : vector<2x4xf32> to vector<1x1x2x4xf32>
    tpu.vector_store %arg11[%c0_72, %c5, %c0_73, %c0_74], %109 {strides = array<i32>} : memref<1x8x2x4xf32, #tpu.memory_space<vmem>>, vector<1x1x2x4xf32>,
    %110 = tpu.concatenate %104, %106 in 1 : vector<2x32xf32>, vector<2x4xf32> -> vector<2x36xf32>
    %cst_75 = arith.constant dense<0.000000e+00> : vector<2x32xf32>
    %111 = tpu.matmul %110, %39, %cst_75 {dimension_numbers = #tpu.dot_dimension_numbers<[1], [0], [0], [1], [0, 0, 1, 1], [], []>} : vector<2x36xf32>, vector<36x32xf32>, vector<2x32xf32> -> vector<2x32xf32>
    %112 = arith.addf %37, %111 : vector<2x32xf32>
    %cst_76 = arith.constant 0.000000e+00 : f32
    %113 = vector.broadcast %cst_76 : f32 to vector<2x32xf32>
    %114 = arith.maximumf %112, %113 : vector<2x32xf32>
    %cst_77 = arith.constant dense<0.000000e+00> : vector<2x32xf32>
    %115 = tpu.matmul %114, %2, %cst_77 {dimension_numbers = #tpu.dot_dimension_numbers<[1], [0], [0], [1], [0, 0, 1, 1], [], []>} : vector<2x32xf32>, vector<32x32xf32>, vector<2x32xf32> -> vector<2x32xf32>
    %116 = arith.addf %115, %8 : vector<2x32xf32>
    %cst_78 = arith.constant 0.000000e+00 : f32
    %117 = vector.broadcast %cst_78 : f32 to vector<2x32xf32>
    %118 = arith.maximumf %116, %117 : vector<2x32xf32>
    %cst_79 = arith.constant dense<0.000000e+00> : vector<2x4xf32>
    %119 = tpu.matmul %118, %4, %cst_79 {dimension_numbers = #tpu.dot_dimension_numbers<[1], [0], [0], [1], [0, 0, 1, 1], [], []>} : vector<2x32xf32>, vector<32x4xf32>, vector<2x4xf32> -> vector<2x4xf32>
    %120 = arith.addf %119, %12 : vector<2x4xf32>
    %c0_80 = arith.constant 0 : index
    %c6 = arith.constant 6 : index
    %c0_81 = arith.constant 0 : index
    %c0_82 = arith.constant 0 : index
    %121 = vector.load %arg11[%c0_80, %c6, %c0_81, %c0_82] : memref<1x8x2x4xf32, #tpu.memory_space<vmem>>, vector<1x1x2x4xf32>
    %122 = vector.shape_cast %121 : vector<1x1x2x4xf32> to vector<2x4xf32>
    %123 = vector.shape_cast %120 : vector<2x4xf32> to vector<1x1x2x4xf32>
    tpu.vector_store %arg11[%c0_80, %c6, %c0_81, %c0_82], %123 {strides = array<i32>} : memref<1x8x2x4xf32, #tpu.memory_space<vmem>>, vector<1x1x2x4xf32>,
    %124 = tpu.concatenate %118, %120 in 1 : vector<2x32xf32>, vector<2x4xf32> -> vector<2x36xf32>
    %cst_83 = arith.constant dense<0.000000e+00> : vector<2x32xf32>
    %125 = tpu.matmul %124, %39, %cst_83 {dimension_numbers = #tpu.dot_dimension_numbers<[1], [0], [0], [1], [0, 0, 1, 1], [], []>} : vector<2x36xf32>, vector<36x32xf32>, vector<2x32xf32> -> vector<2x32xf32>
    %126 = arith.addf %37, %125 : vector<2x32xf32>
    %cst_84 = arith.constant 0.000000e+00 : f32
    %127 = vector.broadcast %cst_84 : f32 to vector<2x32xf32>
    %128 = arith.maximumf %126, %127 : vector<2x32xf32>
    %cst_85 = arith.constant dense<0.000000e+00> : vector<2x32xf32>
    %129 = tpu.matmul %128, %2, %cst_85 {dimension_numbers = #tpu.dot_dimension_numbers<[1], [0], [0], [1], [0, 0, 1, 1], [], []>} : vector<2x32xf32>, vector<32x32xf32>, vector<2x32xf32> -> vector<2x32xf32>
    %130 = arith.addf %129, %8 : vector<2x32xf32>
    %cst_86 = arith.constant 0.000000e+00 : f32
    %131 = vector.broadcast %cst_86 : f32 to vector<2x32xf32>
    %132 = arith.maximumf %130, %131 : vector<2x32xf32>
    %cst_87 = arith.constant dense<0.000000e+00> : vector<2x4xf32>
    %133 = tpu.matmul %132, %4, %cst_87 {dimension_numbers = #tpu.dot_dimension_numbers<[1], [0], [0], [1], [0, 0, 1, 1], [], []>} : vector<2x32xf32>, vector<32x4xf32>, vector<2x4xf32> -> vector<2x4xf32>
    %134 = arith.addf %133, %12 : vector<2x4xf32>
    %c0_88 = arith.constant 0 : index
    %c7 = arith.constant 7 : index
    %c0_89 = arith.constant 0 : index
    %c0_90 = arith.constant 0 : index
    %135 = vector.load %arg11[%c0_88, %c7, %c0_89, %c0_90] : memref<1x8x2x4xf32, #tpu.memory_space<vmem>>, vector<1x1x2x4xf32>
    %136 = vector.shape_cast %135 : vector<1x1x2x4xf32> to vector<2x4xf32>
    %137 = vector.shape_cast %134 : vector<2x4xf32> to vector<1x1x2x4xf32>
    tpu.vector_store %arg11[%c0_88, %c7, %c0_89, %c0_90], %137 {strides = array<i32>} : memref<1x8x2x4xf32, #tpu.memory_space<vmem>>, vector<1x1x2x4xf32>,
    return
  }
  func.func @transform_0(%arg0: i32) -> (i32, i32) {
    %c0_i32 = arith.constant 0 : i32
    %c0_i32_0 = arith.constant 0 : i32
    %c0_i32_1 = arith.constant 0 : i32
    return %c0_i32, %c0_i32_0 : i32, i32
  }
  func.func @transform_1(%arg0: i32) -> (i32, i32) {
    %c0_i32 = arith.constant 0 : i32
    %c0_i32_0 = arith.constant 0 : i32
    %c0_i32_1 = arith.constant 0 : i32
    return %c0_i32, %c0_i32_0 : i32, i32
  }
  func.func @transform_2(%arg0: i32) -> (i32, i32) {
    %c0_i32 = arith.constant 0 : i32
    %c0_i32_0 = arith.constant 0 : i32
    %c0_i32_1 = arith.constant 0 : i32
    return %c0_i32, %c0_i32_0 : i32, i32
  }
  func.func @transform_3(%arg0: i32) -> (i32, i32, i32) {
    %c0_i32 = arith.constant 0 : i32
    %c0_i32_0 = arith.constant 0 : i32
    %c0_i32_1 = arith.constant 0 : i32
    return %arg0, %c0_i32, %c0_i32_0 : i32, i32, i32
  }
  func.func @transform_4(%arg0: i32) -> (i32, i32, i32) {
    %c0_i32 = arith.constant 0 : i32
    %c0_i32_0 = arith.constant 0 : i32
    %c0_i32_1 = arith.constant 0 : i32
    return %arg0, %c0_i32, %c0_i32_0 : i32, i32, i32
  }
  func.func @transform_5(%arg0: i32) -> (i32, i32, i32) {
    %c0_i32 = arith.constant 0 : i32
    %c0_i32_0 = arith.constant 0 : i32
    %c0_i32_1 = arith.constant 0 : i32
    return %arg0, %c0_i32, %c0_i32_0 : i32, i32, i32
  }
  func.func @transform_6(%arg0: i32) -> (i32, i32, i32) {
    %c0_i32 = arith.constant 0 : i32
    %c0_i32_0 = arith.constant 0 : i32
    %c0_i32_1 = arith.constant 0 : i32
    return %arg0, %c0_i32, %c0_i32_0 : i32, i32, i32
  }
  func.func @transform_7(%arg0: i32) -> (i32, i32, i32) {
    %c0_i32 = arith.constant 0 : i32
    %c0_i32_0 = arith.constant 0 : i32
    %c0_i32_1 = arith.constant 0 : i32
    return %arg0, %c0_i32, %c0_i32_0 : i32, i32, i32
  }
  func.func @transform_8(%arg0: i32) -> (i32, i32, i32) {
    %c0_i32 = arith.constant 0 : i32
    %c0_i32_0 = arith.constant 0 : i32
    %c0_i32_1 = arith.constant 0 : i32
    return %arg0, %c0_i32, %c0_i32_0 : i32, i32, i32
  }
  func.func @transform_9(%arg0: i32) -> (i32, i32, i32) {
    %c0_i32 = arith.constant 0 : i32
    %c0_i32_0 = arith.constant 0 : i32
    %c0_i32_1 = arith.constant 0 : i32
    return %arg0, %c0_i32, %c0_i32_0 : i32, i32, i32
  }
  func.func @transform_10(%arg0: i32) -> (i32, i32, i32, i32) {
    %c0_i32 = arith.constant 0 : i32
    %c0_i32_0 = arith.constant 0 : i32
    %c0_i32_1 = arith.constant 0 : i32
    %c0_i32_2 = arith.constant 0 : i32
    return %arg0, %c0_i32, %c0_i32_0, %c0_i32_1 : i32, i32, i32, i32
  }
}

</mosaic_0001>

<llo_original>
// kernel: tpu_custom_call.1
$region0: #{tpu_custom_call.1}
  #allocation0 [shape = 'u32[]', space=smem, size = 0x4, offset = 0x4, fixed_abs, tag = 'smem constant byte address 0x4 - core index']
  #allocation1 [shape = 'u32[144,128]{1,0:T(1,128)}', space=vmem, size = 0x12000, scoped, tag = 'internal scratch']
  %s0 = inlined_call_operand.vmem [shape: f32[2,32], index: 0, kind: input, shape index: {}]
  %s1 = inlined_call_operand.vmem [shape: f32[32,32], index: 1, kind: input, shape index: {}]
  %s2 = inlined_call_operand.hbm [shape: f32[1,32], index: 2, kind: input, shape index: {}]
  %s3 = inlined_call_operand.vmem [shape: f32[2,32,32], index: 3, kind: input, shape index: {}]
  %s4 = inlined_call_operand.vmem [shape: f32[2,36,32], index: 4, kind: input, shape index: {}]
  %s5 = inlined_call_operand.hbm [shape: f32[2,1,32], index: 5, kind: input, shape index: {}]
  %s6 = inlined_call_operand.vmem [shape: f32[2,32,32], index: 6, kind: input, shape index: {}]
  %s7 = inlined_call_operand.vmem [shape: f32[2,1,32], index: 7, kind: input, shape index: {}]
  %s8 = inlined_call_operand.vmem [shape: f32[2,32,4], index: 8, kind: input, shape index: {}]
  %s9 = inlined_call_operand.vmem [shape: f32[2,1,4], index: 9, kind: input, shape index: {}]
  %s10 = inlined_call_operand.vmem [shape: f32[2,8,2,4], index: 10, kind: output, shape index: {}]
  %s11 = sld [smem:[#allocation0]]
  $region81: #{tpu_custom_call.1} parent=0
    _
  %s13 = ssub.s32 1, %s11
  %s14 = scalar_select 0, %s13, %s11
  $region1: #{tpu_custom_call.1} parent=0
    #allocation2 [shape = 'u8[512]{0}', space=vmem, size = 0x400, scoped, tag = 'input window, operand 2, single buffered']
    #allocation3 [shape = 's32[2]{0}', space=sflag, size = 0x8, scoped, tag = 'scoped memory for tpu_custom_call.1']
    #allocation4 [shape = 'u8[1024]{0}', space=vmem, size = 0x400, scoped, tag = 'input window, operand 5']
    #allocation5 [shape = 's32[2]{0}', space=sflag, size = 0x8, scoped, tag = 'scoped memory for tpu_custom_call.1']
    %15 = vsyncpa [#allocation3], 0
    %16 = vsyncpa [#allocation5], 0
    %s17 = scalar_lea.sflag [#allocation5], 1
    %18 = vsyncpa %s17, 0
    loop: start=0, step=1, limit=4
    $region2: #{tpu_custom_call.1} parent=1 // loop_pre_header
      _
    $region3: #{tpu_custom_call.1} parent=1 // loop_header
      %s20 = sphi 0, %s24
      %p21 = scmp.ge.s32.totalorder %s20, 4
      %s28 = sphi 0, %s28
      %s30 = sphi 0, %s28
      %s31 = sphi 0, %s30
      %s45 = sphi 0, %s31
      %s49 = sphi 0, %s49
      %s51 = sphi 0, %s49
      %s52 = sphi 0, %s51
      %s66 = sphi 0, %s52
      %s70 = sphi 0, %s70
      %s72 = sphi 0, %s70
      %s73 = sphi 0, %s72
      %s87 = sphi 0, %s73
      %s93 = sphi 0, %s95
      %s96 = sphi 0, %s93
      %s97 = sphi 0, %s96
      %s113 = sphi 0, %s97
      %s119 = sphi 0, %s121
      %s122 = sphi 0, %s119
      %s123 = sphi 0, %s122
      %s139 = sphi 0, %s123
      %s145 = sphi 0, %s147
      %s148 = sphi 0, %s145
      %s149 = sphi 0, %s148
      %s165 = sphi 0, %s149
      %s171 = sphi 0, %s173
      %s174 = sphi 0, %s171
      %s175 = sphi 0, %s174
      %s191 = sphi 0, %s175
      %s197 = sphi 0, %s199
      %s200 = sphi 0, %s197
      %s201 = sphi 0, %s200
      %s217 = sphi 0, %s201
      %s223 = sphi 0, %s225
      %s226 = sphi 0, %s223
      %s227 = sphi 0, %s226
      %s243 = sphi 0, %s227
      %s249 = sphi 0, %s251
      %s252 = sphi 0, %s249
      %s253 = sphi 0, %s252
      %s269 = sphi 0, %s253
      %s275 = sphi 0, %s277
      %s278 = sphi 0, %s275
      %s279 = sphi 0, %s278
      %s295 = sphi 0, %s279
    $region4: #{tpu_custom_call.1} parent=1 // loop_header_branch
      %23 = sbr.rel (%p21) target = $region8
    $region5: #{tpu_custom_call.1} parent=1 // loop_body
      %s25 = ssub.s32 %s20, 1
      %s26 = ssub.s32 %s20, 2
      %s27 = sadd.s32 %s20, 1
      %s29 = sadd.s32 %s28, 1
      %p32 = scmp.eq.s32.totalorder %s20, 1
      %p33 = scmp.ne.s32.totalorder %s28, %s30
      %p34 = scmp.eq.s32.totalorder %s20, 0
      %p35 = por %p33, %p34
      %p36 = scmp.ne.s32.totalorder %s28, %s30
      %p37 = scmp.eq.s32.totalorder %s25, 1
      %p38 = por %p36, %p37
      %p39 = scmp.ne.s32.totalorder %s30, %s31
      %p40 = scmp.eq.s32.totalorder %s25, 0
      %p41 = por %p39, %p40
      %p42 = scmp.ne.s32.totalorder %s30, %s31
      %p43 = scmp.eq.s32.totalorder %s26, 1
      %p44 = por %p42, %p43
      %p46 = scmp.ne.s32.totalorder %s31, %s45
      %p47 = scmp.eq.s32.totalorder %s26, 0
      %p48 = por %p46, %p47
      %s50 = sadd.s32 %s49, 1
      %p53 = scmp.eq.s32.totalorder %s20, 1
      %p54 = scmp.ne.s32.totalorder %s49, %s51
      %p55 = scmp.eq.s32.totalorder %s20, 0
      %p56 = por %p54, %p55
      %p57 = scmp.ne.s32.totalorder %s49, %s51
      %p58 = scmp.eq.s32.totalorder %s25, 1
      %p59 = por %p57, %p58
      %p60 = scmp.ne.s32.totalorder %s51, %s52
      %p61 = scmp.eq.s32.totalorder %s25, 0
      %p62 = por %p60, %p61
      %p63 = scmp.ne.s32.totalorder %s51, %s52
      %p64 = scmp.eq.s32.totalorder %s26, 1
      %p65 = por %p63, %p64
      %p67 = scmp.ne.s32.totalorder %s52, %s66
      %p68 = scmp.eq.s32.totalorder %s26, 0
      %p69 = por %p67, %p68
      %s71 = sadd.s32 %s70, 1
      %p74 = scmp.eq.s32.totalorder %s20, 1
      %p75 = scmp.ne.s32.totalorder %s70, %s72
      %p76 = scmp.eq.s32.totalorder %s20, 0
      %p77 = por %p75, %p76
      %p78 = scmp.ne.s32.totalorder %s70, %s72
      %p79 = scmp.eq.s32.totalorder %s25, 1
      %p80 = por %p78, %p79
      %p81 = scmp.ne.s32.totalorder %s72, %s73
      %p82 = scmp.eq.s32.totalorder %s25, 0
      %p83 = por %p81, %p82
      %p84 = scmp.ne.s32.totalorder %s72, %s73
      %p85 = scmp.eq.s32.totalorder %s26, 1
      %p86 = por %p84, %p85
      %p88 = scmp.ne.s32.totalorder %s73, %s87
      %p89 = scmp.eq.s32.totalorder %s26, 0
      %p90 = por %p88, %p89
      %s91 = ssub.s32 %s20, %s27
      %p92 = scmp.eq.s32.totalorder %s91, 0
      %s94 = sadd.s32 %s93, 1
      %s95 = scalar_select %p92, %s93, %s94
      %p98 = pneg %p92
      %p99 = scmp.eq.s32.totalorder %s20, 1
      %p100 = por %p98, %p99
      %p101 = scmp.ne.s32.totalorder %s93, %s96
      %p102 = scmp.eq.s32.totalorder %s20, 0
      %p103 = por %p101, %p102
      %p104 = scmp.ne.s32.totalorder %s93, %s96
      %p105 = scmp.eq.s32.totalorder %s25, 1
      %p106 = por %p104, %p105
      %p107 = scmp.ne.s32.totalorder %s96, %s97
      %p108 = scmp.eq.s32.totalorder %s25, 0
      %p109 = por %p107, %p108
      %p110 = scmp.ne.s32.totalorder %s96, %s97
      %p111 = scmp.eq.s32.totalorder %s26, 1
      %p112 = por %p110, %p111
      %p114 = scmp.ne.s32.totalorder %s97, %s113
      %p115 = scmp.eq.s32.totalorder %s26, 0
      %p116 = por %p114, %p115
      %s117 = ssub.s32 %s20, %s27
      %p118 = scmp.eq.s32.totalorder %s117, 0
      %s120 = sadd.s32 %s119, 1
      %s121 = scalar_select %p118, %s119, %s120
      %p124 = pneg %p118
      %p125 = scmp.eq.s32.totalorder %s20, 1
      %p126 = por %p124, %p125
      %p127 = scmp.ne.s32.totalorder %s119, %s122
      %p128 = scmp.eq.s32.totalorder %s20, 0
      %p129 = por %p127, %p128
      %p130 = scmp.ne.s32.totalorder %s119, %s122
      %p131 = scmp.eq.s32.totalorder %s25, 1
      %p132 = por %p130, %p131
      %p133 = scmp.ne.s32.totalorder %s122, %s123
      %p134 = scmp.eq.s32.totalorder %s25, 0
      %p135 = por %p133, %p134
      %p136 = scmp.ne.s32.totalorder %s122, %s123
      %p137 = scmp.eq.s32.totalorder %s26, 1
      %p138 = por %p136, %p137
      %p140 = scmp.ne.s32.totalorder %s123, %s139
      %p141 = scmp.eq.s32.totalorder %s26, 0
      %p142 = por %p140, %p141
      %s143 = ssub.s32 %s20, %s27
      %p144 = scmp.eq.s32.totalorder %s143, 0
      %s146 = sadd.s32 %s145, 1
      %s147 = scalar_select %p144, %s145, %s146
      %p150 = pneg %p144
      %p151 = scmp.eq.s32.totalorder %s20, 1
      %p152 = por %p150, %p151
      %p153 = scmp.ne.s32.totalorder %s145, %s148
      %p154 = scmp.eq.s32.totalorder %s20, 0
      %p155 = por %p153, %p154
      %p156 = scmp.ne.s32.totalorder %s145, %s148
      %p157 = scmp.eq.s32.totalorder %s25, 1
      %p158 = por %p156, %p157
      %p159 = scmp.ne.s32.totalorder %s148, %s149
      %p160 = scmp.eq.s32.totalorder %s25, 0
      %p161 = por %p159, %p160
      %p162 = scmp.ne.s32.totalorder %s148, %s149
      %p163 = scmp.eq.s32.totalorder %s26, 1
      %p164 = por %p162, %p163
      %p166 = scmp.ne.s32.totalorder %s149, %s165
      %p167 = scmp.eq.s32.totalorder %s26, 0
      %p168 = por %p166, %p167
      %s169 = ssub.s32 %s20, %s27
      %p170 = scmp.eq.s32.totalorder %s169, 0
      %s172 = sadd.s32 %s171, 1
      %s173 = scalar_select %p170, %s171, %s172
      %p176 = pneg %p170
      %p177 = scmp.eq.s32.totalorder %s20, 1
      %p178 = por %p176, %p177
      %p179 = scmp.ne.s32.totalorder %s171, %s174
      %p180 = scmp.eq.s32.totalorder %s20, 0
      %p181 = por %p179, %p180
      %p182 = scmp.ne.s32.totalorder %s171, %s174
      %p183 = scmp.eq.s32.totalorder %s25, 1
      %p184 = por %p182, %p183
      %p185 = scmp.ne.s32.totalorder %s174, %s175
      %p186 = scmp.eq.s32.totalorder %s25, 0
      %p187 = por %p185, %p186
      %p188 = scmp.ne.s32.totalorder %s174, %s175
      %p189 = scmp.eq.s32.totalorder %s26, 1
      %p190 = por %p188, %p189
      %p192 = scmp.ne.s32.totalorder %s175, %s191
      %p193 = scmp.eq.s32.totalorder %s26, 0
      %p194 = por %p192, %p193
      %s195 = ssub.s32 %s20, %s27
      %p196 = scmp.eq.s32.totalorder %s195, 0
      %s198 = sadd.s32 %s197, 1
      %s199 = scalar_select %p196, %s197, %s198
      %p202 = pneg %p196
      %p203 = scmp.eq.s32.totalorder %s20, 1
      %p204 = por %p202, %p203
      %p205 = scmp.ne.s32.totalorder %s197, %s200
      %p206 = scmp.eq.s32.totalorder %s20, 0
      %p207 = por %p205, %p206
      %p208 = scmp.ne.s32.totalorder %s197, %s200
      %p209 = scmp.eq.s32.totalorder %s25, 1
      %p210 = por %p208, %p209
      %p211 = scmp.ne.s32.totalorder %s200, %s201
      %p212 = scmp.eq.s32.totalorder %s25, 0
      %p213 = por %p211, %p212
      %p214 = scmp.ne.s32.totalorder %s200, %s201
      %p215 = scmp.eq.s32.totalorder %s26, 1
      %p216 = por %p214, %p215
      %p218 = scmp.ne.s32.totalorder %s201, %s217
      %p219 = scmp.eq.s32.totalorder %s26, 0
      %p220 = por %p218, %p219
      %s221 = ssub.s32 %s20, %s27
      %p222 = scmp.eq.s32.totalorder %s221, 0
      %s224 = sadd.s32 %s223, 1
      %s225 = scalar_select %p222, %s223, %s224
      %p228 = pneg %p222
      %p229 = scmp.eq.s32.totalorder %s20, 1
      %p230 = por %p228, %p229
      %p231 = scmp.ne.s32.totalorder %s223, %s226
      %p232 = scmp.eq.s32.totalorder %s20, 0
      %p233 = por %p231, %p232
      %p234 = scmp.ne.s32.totalorder %s223, %s226
      %p235 = scmp.eq.s32.totalorder %s25, 1
      %p236 = por %p234, %p235
      %p237 = scmp.ne.s32.totalorder %s226, %s227
      %p238 = scmp.eq.s32.totalorder %s25, 0
      %p239 = por %p237, %p238
      %p240 = scmp.ne.s32.totalorder %s226, %s227
      %p241 = scmp.eq.s32.totalorder %s26, 1
      %p242 = por %p240, %p241
      %p244 = scmp.ne.s32.totalorder %s227, %s243
      %p245 = scmp.eq.s32.totalorder %s26, 0
      %p246 = por %p244, %p245
      %s247 = ssub.s32 %s20, %s27
      %p248 = scmp.eq.s32.totalorder %s247, 0
      %s250 = sadd.s32 %s249, 1
      %s251 = scalar_select %p248, %s249, %s250
      %p254 = pneg %p248
      %p255 = scmp.eq.s32.totalorder %s20, 1
      %p256 = por %p254, %p255
      %p257 = scmp.ne.s32.totalorder %s249, %s252
      %p258 = scmp.eq.s32.totalorder %s20, 0
      %p259 = por %p257, %p258
      %p260 = scmp.ne.s32.totalorder %s249, %s252
      %p261 = scmp.eq.s32.totalorder %s25, 1
      %p262 = por %p260, %p261
      %p263 = scmp.ne.s32.totalorder %s252, %s253
      %p264 = scmp.eq.s32.totalorder %s25, 0
      %p265 = por %p263, %p264
      %p266 = scmp.ne.s32.totalorder %s252, %s253
      %p267 = scmp.eq.s32.totalorder %s26, 1
      %p268 = por %p266, %p267
      %p270 = scmp.ne.s32.totalorder %s253, %s269
      %p271 = scmp.eq.s32.totalorder %s26, 0
      %p272 = por %p270, %p271
      %s273 = ssub.s32 %s20, %s27
      %p274 = scmp.eq.s32.totalorder %s273, 0
      %s276 = sadd.s32 %s275, 1
      %s277 = scalar_select %p274, %s275, %s276
      %p280 = pneg %p274
      %p281 = scmp.eq.s32.totalorder %s20, 1
      %p282 = por %p280, %p281
      %p283 = scmp.ne.s32.totalorder %s275, %s278
      %p284 = scmp.eq.s32.totalorder %s20, 0
      %p285 = por %p283, %p284
      %p286 = scmp.ne.s32.totalorder %s275, %s278
      %p287 = scmp.eq.s32.totalorder %s25, 1
      %p288 = por %p286, %p287
      %p289 = scmp.ne.s32.totalorder %s278, %s279
      %p290 = scmp.eq.s32.totalorder %s25, 0
      %p291 = por %p289, %p290
      %p292 = scmp.ne.s32.totalorder %s278, %s279
      %p293 = scmp.eq.s32.totalorder %s26, 1
      %p294 = por %p292, %p293
      %p296 = scmp.ne.s32.totalorder %s279, %s295
      %p297 = scmp.eq.s32.totalorder %s26, 0
      %p298 = por %p296, %p297
      %p299 = scmp.le.s32.totalorder 1, %s20
      %p300 = scmp.lt.s32.totalorder %s20, 3
      %p301 = pnand %p299, %p300
      %p302 = pneg %p301
      // Predicated region
      $region9: #{tpu_custom_call.1} parent=5 // pred_check
        _
      $region10: #{tpu_custom_call.1} parent=5 // pred_check_branch
        %304 = sbr.rel (%p301) target = $region12
      $region11: #{tpu_custom_call.1} parent=5 // pred_region
        %s305 = ssub.s32 %s20, 1
        // Predicated region
        $region13: #{tpu_custom_call.1} parent=11 // pred_check
          %p306 = pneg %p41
        $region14: #{tpu_custom_call.1} parent=11 // pred_check_branch
          %308 = sbr.rel (%p306) target = $region16
        $region15: #{tpu_custom_call.1} parent=11 // pred_region
          _
        $region16: #{tpu_custom_call.1} parent=11 // pred_fallthru
          _
        // Predicated region
        $region17: #{tpu_custom_call.1} parent=11 // pred_check
          %p309 = pneg %p62
        $region18: #{tpu_custom_call.1} parent=11 // pred_check_branch
          %311 = sbr.rel (%p309) target = $region20
        $region19: #{tpu_custom_call.1} parent=11 // pred_region
          _
        $region20: #{tpu_custom_call.1} parent=11 // pred_fallthru
          _
        // Predicated region
        $region21: #{tpu_custom_call.1} parent=11 // pred_check
          %p312 = pneg %p83
        $region22: #{tpu_custom_call.1} parent=11 // pred_check_branch
          %314 = sbr.rel (%p312) target = $region24
        $region23: #{tpu_custom_call.1} parent=11 // pred_region
          %s316 = ssub.s32 16, 16
          %317 = vsyncadd [#allocation3], %s316
          %s319 = sshll.u32 [#allocation2], 4
          %s320 = int_to_ptr.vmem [resolvable:$true] %s319
          %322 = dma.hbm_to_vmem [thread:$0]  %s2, 16, %s320, [#allocation3]
        $region24: #{tpu_custom_call.1} parent=11 // pred_fallthru
          _
      $region12: #{tpu_custom_call.1} parent=5 // pred_fallthru
        _
      %p323 = scmp.lt.s32.totalorder %s20, 2
      // Predicated region
      $region25: #{tpu_custom_call.1} parent=5 // pred_check
        %p324 = pneg %p323
      $region26: #{tpu_custom_call.1} parent=5 // pred_check_branch
        %326 = sbr.rel (%p324) target = $region28
      $region27: #{tpu_custom_call.1} parent=5 // pred_region
        // Predicated region
        $region29: #{tpu_custom_call.1} parent=27 // pred_check
          %p327 = pneg %p103
        $region30: #{tpu_custom_call.1} parent=27 // pred_check_branch
          %329 = sbr.rel (%p327) target = $region32
        $region31: #{tpu_custom_call.1} parent=27 // pred_region
          %p330 = scmp.lt.s32.totalorder %s20, 1
          %s331 = scalar_select %p330, %s20, 1
          %s332 = smul.addr %s331, 4
          %s333 = smul.addr %s332, 8
          %s334 = scalar_lea.vmem %s3, %s333
        $region32: #{tpu_custom_call.1} parent=27 // pred_fallthru
          _
        // Predicated region
        $region33: #{tpu_custom_call.1} parent=27 // pred_check
          %p335 = pneg %p129
        $region34: #{tpu_custom_call.1} parent=27 // pred_check_branch
          %337 = sbr.rel (%p335) target = $region36
        $region35: #{tpu_custom_call.1} parent=27 // pred_region
          %p338 = scmp.lt.s32.totalorder %s20, 1
          %s339 = scalar_select %p338, %s20, 1
          %s340 = smul.addr %s339, 5
          %s341 = smul.addr %s340, 8
          %s342 = scalar_lea.vmem %s4, %s341
        $region36: #{tpu_custom_call.1} parent=27 // pred_fallthru
          _
        // Predicated region
        $region37: #{tpu_custom_call.1} parent=27 // pred_check
          %p343 = pneg %p155
        $region38: #{tpu_custom_call.1} parent=27 // pred_check_branch
          %345 = sbr.rel (%p343) target = $region40
        $region39: #{tpu_custom_call.1} parent=27 // pred_region
          %s346 = sand.u32 %s145, 1
          %s347 = scalar_lea.sflag [#allocation5], %s346
          %s348 = sand.u32 %s145, 1
          %s349 = scalar_lea.vmem [#allocation4], %s348
          %s351 = ssub.s32 16, 16
          %352 = vsyncadd %s347, %s351
          %s353 = smul.addr %s20, 16
          %s354 = scalar_lea.hbm %s5, %s353
          %s356 = sshll.u32 %s349, 4
          %s357 = int_to_ptr.vmem [resolvable:$true] %s356
          %359 = dma.hbm_to_vmem [thread:$0]  %s354, 16, %s357, %s347
        $region40: #{tpu_custom_call.1} parent=27 // pred_fallthru
          _
        // Predicated region
        $region41: #{tpu_custom_call.1} parent=27 // pred_check
          %p360 = pneg %p181
        $region42: #{tpu_custom_call.1} parent=27 // pred_check_branch
          %362 = sbr.rel (%p360) target = $region44
        $region43: #{tpu_custom_call.1} parent=27 // pred_region
          %p363 = scmp.lt.s32.totalorder %s20, 1
          %s364 = scalar_select %p363, %s20, 1
          %s365 = smul.addr %s364, 4
          %s366 = smul.addr %s365, 8
          %s367 = scalar_lea.vmem %s6, %s366
        $region44: #{tpu_custom_call.1} parent=27 // pred_fallthru
          _
        // Predicated region
        $region45: #{tpu_custom_call.1} parent=27 // pred_check
          %p368 = pneg %p207
        $region46: #{tpu_custom_call.1} parent=27 // pred_check_branch
          %370 = sbr.rel (%p368) target = $region48
        $region47: #{tpu_custom_call.1} parent=27 // pred_region
          %p371 = scmp.lt.s32.totalorder %s20, 1
          %s372 = scalar_select %p371, %s20, 1
          %s373 = scalar_lea.vmem %s7, %s372
        $region48: #{tpu_custom_call.1} parent=27 // pred_fallthru
          _
        // Predicated region
        $region49: #{tpu_custom_call.1} parent=27 // pred_check
          %p374 = pneg %p233
        $region50: #{tpu_custom_call.1} parent=27 // pred_check_branch
          %376 = sbr.rel (%p374) target = $region52
        $region51: #{tpu_custom_call.1} parent=27 // pred_region
          %p377 = scmp.lt.s32.totalorder %s20, 1
          %s378 = scalar_select %p377, %s20, 1
          %s379 = smul.addr %s378, 4
          %s380 = smul.addr %s379, 8
          %s381 = scalar_lea.vmem %s8, %s380
        $region52: #{tpu_custom_call.1} parent=27 // pred_fallthru
          _
        // Predicated region
        $region53: #{tpu_custom_call.1} parent=27 // pred_check
          %p382 = pneg %p259
        $region54: #{tpu_custom_call.1} parent=27 // pred_check_branch
          %384 = sbr.rel (%p382) target = $region56
        $region55: #{tpu_custom_call.1} parent=27 // pred_region
          %p385 = scmp.lt.s32.totalorder %s20, 1
          %s386 = scalar_select %p385, %s20, 1
          %s387 = scalar_lea.vmem %s9, %s386
        $region56: #{tpu_custom_call.1} parent=27 // pred_fallthru
          _
      $region28: #{tpu_custom_call.1} parent=5 // pred_fallthru
        _
      %p388 = scmp.le.s32.totalorder 1, %s20
      %p389 = scmp.lt.s32.totalorder %s20, 3
      %p390 = pnand %p388, %p389
      %p391 = pneg %p390
      // Predicated region
      $region57: #{tpu_custom_call.1} parent=5 // pred_check
        _
      $region58: #{tpu_custom_call.1} parent=5 // pred_check_branch
        %393 = sbr.rel (%p390) target = $region60
      $region59: #{tpu_custom_call.1} parent=5 // pred_region
        %s394 = ssub.s32 %s20, 1
        // Predicated region
        $region61: #{tpu_custom_call.1} parent=59 // pred_check
          %p395 = pneg %p83
        $region62: #{tpu_custom_call.1} parent=59 // pred_check_branch
          %397 = sbr.rel (%p395) target = $region64
        $region63: #{tpu_custom_call.1} parent=59 // pred_region
          %398 = dma.done [#allocation3], 16
        $region64: #{tpu_custom_call.1} parent=59 // pred_fallthru
          _
        %s399 = sand.u32 %s148, 1
        %s400 = scalar_lea.sflag [#allocation5], %s399
        %s401 = sand.u32 %s148, 1
        %s402 = scalar_lea.vmem [#allocation4], %s401
        // Predicated region
        $region65: #{tpu_custom_call.1} parent=59 // pred_check
          %p403 = pneg %p161
        $region66: #{tpu_custom_call.1} parent=59 // pred_check_branch
          %405 = sbr.rel (%p403) target = $region68
        $region67: #{tpu_custom_call.1} parent=59 // pred_region
          %406 = dma.done %s400, 16
        $region68: #{tpu_custom_call.1} parent=59 // pred_fallthru
          _
        %p407 = pneg %p41
        %p408 = pneg %p38
        %p409 = pneg %p62
        %p410 = pneg %p59
        %p411 = pneg %p83
        %p412 = pneg %p80
        %p413 = scmp.lt.s32.totalorder %s25, 1
        %s414 = scalar_select %p413, %s25, 1
        %s415 = smul.addr %s414, 4
        %s416 = smul.addr %s415, 8
        %s417 = scalar_lea.vmem %s3, %s416
        %p418 = pneg %p109
        %p419 = pneg %p106
        %p420 = scmp.lt.s32.totalorder %s25, 1
        %s421 = scalar_select %p420, %s25, 1
        %s422 = smul.addr %s421, 5
        %s423 = smul.addr %s422, 8
        %s424 = scalar_lea.vmem %s4, %s423
        %p425 = pneg %p135
        %p426 = pneg %p132
        %s427 = sand.u32 %s148, 1
        %s428 = scalar_lea.sflag [#allocation5], %s427
        %s429 = sand.u32 %s148, 1
        %s430 = scalar_lea.vmem [#allocation4], %s429
        %p431 = pneg %p161
        %p432 = pneg %p158
        %p433 = scmp.lt.s32.totalorder %s25, 1
        %s434 = scalar_select %p433, %s25, 1
        %s435 = smul.addr %s434, 4
        %s436 = smul.addr %s435, 8
        %s437 = scalar_lea.vmem %s6, %s436
        %p438 = pneg %p187
        %p439 = pneg %p184
        %p440 = scmp.lt.s32.totalorder %s25, 1
        %s441 = scalar_select %p440, %s25, 1
        %s442 = scalar_lea.vmem %s7, %s441
        %p443 = pneg %p213
        %p444 = pneg %p210
        %p445 = scmp.lt.s32.totalorder %s25, 1
        %s446 = scalar_select %p445, %s25, 1
        %s447 = smul.addr %s446, 4
        %s448 = smul.addr %s447, 8
        %s449 = scalar_lea.vmem %s8, %s448
        %p450 = pneg %p239
        %p451 = pneg %p236
        %p452 = scmp.lt.s32.totalorder %s25, 1
        %s453 = scalar_select %p452, %s25, 1
        %s454 = scalar_lea.vmem %s9, %s453
        %p455 = pneg %p265
        %p456 = pneg %p262
        %p457 = pneg %p291
        %p458 = pneg %p288
        %p459 = scmp.lt.s32.totalorder %s25, 1
        %s460 = scalar_select %p459, %s25, 1
        %s461 = smul.addr %s460, 8
        %s462 = smul.addr %s461, 2
        %s463 = scalar_lea.vmem %s10, %s462
        %p464 = scmp.lt.s32.totalorder %s25, 1
        %s465 = scalar_select %p464, %s25, 1
        %s466 = smul.addr %s465, 4
        %s467 = smul.addr %s466, 8
        %s468 = scalar_lea.vmem %s3, %s467
        %p469 = scmp.lt.s32.totalorder %s25, 1
        %s470 = scalar_select %p469, %s25, 1
        %s471 = smul.addr %s470, 5
        %s472 = smul.addr %s471, 8
        %s473 = scalar_lea.vmem %s4, %s472
        %p474 = scmp.lt.s32.totalorder %s25, 1
        %s475 = scalar_select %p474, %s25, 1
        %s476 = smul.addr %s475, 4
        %s477 = smul.addr %s476, 8
        %s478 = scalar_lea.vmem %s6, %s477
        %p479 = scmp.lt.s32.totalorder %s25, 1
        %s480 = scalar_select %p479, %s25, 1
        %s481 = scalar_lea.vmem %s7, %s480
        %p482 = scmp.lt.s32.totalorder %s25, 1
        %s483 = scalar_select %p482, %s25, 1
        %s484 = smul.addr %s483, 4
        %s485 = smul.addr %s484, 8
        %s486 = scalar_lea.vmem %s8, %s485
        %p487 = scmp.lt.s32.totalorder %s25, 1
        %s488 = scalar_select %p487, %s25, 1
        %s489 = scalar_lea.vmem %s9, %s488
        %p490 = scmp.lt.s32.totalorder %s25, 1
        %s491 = scalar_select %p490, %s25, 1
        %s492 = smul.addr %s491, 8
        %s493 = smul.addr %s492, 2
        %s494 = scalar_lea.vmem %s10, %s493
        %v495 = vld [vmem:[%s0] sm:$0x3]
        %v496 = vld [vmem:[%s478] sm:$0xff]
        %v497 = vld [vmem:[%s478 + $0x8] sm:$0xff]
        %v498 = vld [vmem:[%s478 + $0x10] sm:$0xff]
        %v499 = vld [vmem:[%s478 + $0x18] sm:$0xff]
        %v500 = vld [vmem:[%s486] sm:$0xff]
        %v501 = vld [vmem:[%s486 + $0x8] sm:$0xff]
        %v502 = vld [vmem:[%s486 + $0x10] sm:$0xff]
        %v503 = vld [vmem:[%s486 + $0x18] sm:$0xff]
        %v504 = vld [vmem:[%s481] sm:$0x1]
        %v506 = vlaneseq
        %v507 = vshrl.u32 %v506, 7
        %v508 = vsub.s32 0, %v507
        %v509 = vrot.slane %v504, %v508
        %v511 = vld [vmem:[%s489] sm:$0x1]
        %v513 = vlaneseq
        %v514 = vshrl.u32 %v513, 7
        %v515 = vsub.s32 0, %v514
        %v516 = vrot.slane %v511, %v515
        %v518 = vld [vmem:[%s1] sm:$0xff]
        %v519 = vld [vmem:[%s1 + $0x8] sm:$0xff]
        %v520 = vld [vmem:[%s1 + $0x10] sm:$0xff]
        %v521 = vld [vmem:[%s1 + $0x18] sm:$0xff]
        %v522 = vld [vmem:[#allocation2] sm:$0x1]
        %v524 = vlaneseq
        %v525 = vshrl.u32 %v524, 7
        %v526 = vsub.s32 0, %v525
        %v527 = vrot.slane %v522, %v526
        %vm529 = vcmask 261120
        %v531 = vsel %vm529, %v495, 0
        %533 = vmatprep.subr.mxu0 0.0
        %534 = vmatpush1.msra.mxu0 %v518
        %535 = vmatprep.subr.mxu0 0.0
        %536 = vmatpush1.msra.mxu0 %v519
        %537 = vmatprep.subr.mxu0 0.0
        %538 = vmatpush1.msra.mxu0 %v520
        %539 = vmatprep.subr.mxu0 0.0
        %540 = vmatpush1.msra.mxu0 %v521
        %541 = vmatprep.subr.mxu0 0.0
        %542 = vmatpush1.msra.mxu0 0.0
        %543 = vmatprep.subr.mxu0 0.0
        %544 = vmatpush1.msra.mxu0 0.0
        %545 = vmatprep.subr.mxu0 0.0
        %546 = vmatpush1.msra.mxu0 0.0
        %547 = vmatprep.subr.mxu0 0.0
        %548 = vmatpush1.msra.mxu0 0.0
        %549 = vmatprep.subr.mxu0 0.0
        %550 = vmatpush1.msra.mxu0 0.0
        %551 = vmatprep.subr.mxu0 0.0
        %552 = vmatpush1.msra.mxu0 0.0
        %553 = vmatprep.subr.mxu0 0.0
        %554 = vmatpush1.msra.mxu0 0.0
        %555 = vmatprep.subr.mxu0 0.0
        %556 = vmatpush1.msra.mxu0 0.0
        %557 = vmatprep.subr.mxu0 0.0
        %558 = vmatpush1.msra.mxu0 0.0
        %559 = vmatprep.subr.mxu0 0.0
        %560 = vmatpush1.msra.mxu0 0.0
        %561 = vmatprep.subr.mxu0 0.0
        %562 = vmatpush1.msra.mxu0 0.0
        %563 = vmatprep.subr.mxu0 0.0
        %564 = vmatpush1.msra.mxu0 0.0
        %565 = vmatprep.subr.mxu0 0.0
        %566 = vmatpush1.msra.mxu0 0.0
        %567 = vmatprep.subr.mxu0 0.0
        %568 = vmatpush1.msra.mxu0 0.0
        %569 = vmatprep.subr.mxu0 0.0
        %570 = vmatpush1.msra.mxu0 0.0
        %571 = vmatprep.subr.mxu0 0.0
        %572 = vmatpush1.msra.mxu0 0.0
        %573 = vmatprep.subr.mxu0 0.0
        %574 = vmatpush1.msra.mxu0 0.0
        %575 = vmatprep.subr.mxu0 0.0
        %576 = vmatpush1.msra.mxu0 0.0
        %577 = vmatprep.subr.mxu0 0.0
        %578 = vmatpush1.msra.mxu0 0.0
        %579 = vmatprep.subr.mxu0 0.0
        %580 = vmatpush1.msra.mxu0 0.0
        %581 = vmatprep.subr.mxu0 0.0
        %582 = vmatpush1.msra.mxu0 0.0
        %583 = vmatprep.subr.mxu0 0.0
        %584 = vmatpush1.msra.mxu0 0.0
        %585 = vmatprep.subr.mxu0 0.0
        %586 = vmatpush1.msra.mxu0 0.0
        %587 = vmatprep.subr.mxu0 0.0
        %588 = vmatpush1.msra.mxu0 0.0
        %589 = vmatprep.subr.mxu0 0.0
        %590 = vmatpush1.msra.mxu0 0.0
        %591 = vmatprep.subr.mxu0 0.0
        %592 = vmatpush1.msra.mxu0 0.0
        %593 = vmatprep.subr.mxu0 0.0
        %594 = vmatpush1.msra.mxu0 0.0
        %595 = vmatprep.subr.mxu0 0.0
        %596 = vmatpush1.msra.mxu0 0.0
        %597 = vmatprep.mubr.f32.mxu0 0.0
        %598 = vmatmul.mubr.f32.gmra.mrb[0].mxu0 %v531
        %v599 = vpop.f32.mrb[0].mxu0
        %v600 = vadd.f32 %v527, %v599
        %v601 = vpop.f32.mrb[0].mxu0
        %602 = vdwg.mxu0
        %v603 = vmax.f32 %v600, 0.0
        %v605 = vsel %vm529, %v603, 0
        %607 = vmatprep.subr.mxu0 0.0
        %608 = vmatpush1.msra.mxu0 %v496
        %609 = vmatprep.subr.mxu0 0.0
        %610 = vmatpush1.msra.mxu0 %v497
        %611 = vmatprep.subr.mxu0 0.0
        %612 = vmatpush1.msra.mxu0 %v498
        %613 = vmatprep.subr.mxu0 0.0
        %614 = vmatpush1.msra.mxu0 %v499
        %615 = vmatprep.subr.mxu0 0.0
        %616 = vmatpush1.msra.mxu0 0.0
        %617 = vmatprep.subr.mxu0 0.0
        %618 = vmatpush1.msra.mxu0 0.0
        %619 = vmatprep.subr.mxu0 0.0
        %620 = vmatpush1.msra.mxu0 0.0
        %621 = vmatprep.subr.mxu0 0.0
        %622 = vmatpush1.msra.mxu0 0.0
        %623 = vmatprep.subr.mxu0 0.0
        %624 = vmatpush1.msra.mxu0 0.0
        %625 = vmatprep.subr.mxu0 0.0
        %626 = vmatpush1.msra.mxu0 0.0
        %627 = vmatprep.subr.mxu0 0.0
        %628 = vmatpush1.msra.mxu0 0.0
        %629 = vmatprep.subr.mxu0 0.0
        %630 = vmatpush1.msra.mxu0 0.0
        %631 = vmatprep.subr.mxu0 0.0
        %632 = vmatpush1.msra.mxu0 0.0
        %633 = vmatprep.subr.mxu0 0.0
        %634 = vmatpush1.msra.mxu0 0.0
        %635 = vmatprep.subr.mxu0 0.0
        %636 = vmatpush1.msra.mxu0 0.0
        %637 = vmatprep.subr.mxu0 0.0
        %638 = vmatpush1.msra.mxu0 0.0
        %639 = vmatprep.subr.mxu0 0.0
        %640 = vmatpush1.msra.mxu0 0.0
        %641 = vmatprep.subr.mxu0 0.0
        %642 = vmatpush1.msra.mxu0 0.0
        %643 = vmatprep.subr.mxu0 0.0
        %644 = vmatpush1.msra.mxu0 0.0
        %645 = vmatprep.subr.mxu0 0.0
        %646 = vmatpush1.msra.mxu0 0.0
        %647 = vmatprep.subr.mxu0 0.0
        %648 = vmatpush1.msra.mxu0 0.0
        %649 = vmatprep.subr.mxu0 0.0
        %650 = vmatpush1.msra.mxu0 0.0
        %651 = vmatprep.subr.mxu0 0.0
        %652 = vmatpush1.msra.mxu0 0.0
        %653 = vmatprep.subr.mxu0 0.0
        %654 = vmatpush1.msra.mxu0 0.0
        %655 = vmatprep.subr.mxu0 0.0
        %656 = vmatpush1.msra.mxu0 0.0
        %657 = vmatprep.subr.mxu0 0.0
        %658 = vmatpush1.msra.mxu0 0.0
        %659 = vmatprep.subr.mxu0 0.0
        %660 = vmatpush1.msra.mxu0 0.0
        %661 = vmatprep.subr.mxu0 0.0
        %662 = vmatpush1.msra.mxu0 0.0
        %663 = vmatprep.subr.mxu0 0.0
        %664 = vmatpush1.msra.mxu0 0.0
        %665 = vmatprep.subr.mxu0 0.0
        %666 = vmatpush1.msra.mxu0 0.0
        %667 = vmatprep.subr.mxu0 0.0
        %668 = vmatpush1.msra.mxu0 0.0
        %669 = vmatprep.subr.mxu0 0.0
        %670 = vmatpush1.msra.mxu0 0.0
        %671 = vmatprep.mubr.f32.mxu0 0.0
        %672 = vmatmul.mubr.f32.gmra.mrb[0].mxu0 %v605
        %v673 = vpop.f32.mrb[0].mxu0
        %v674 = vadd.f32 %v509, %v673
        %v675 = vpop.f32.mrb[0].mxu0
        %676 = vdwg.mxu0
        %v677 = vmax.f32 %v674, 0.0
        %v679 = vsel %vm529, %v677, 0
        %681 = vmatprep.subr.mxu0 0.0
        %682 = vmatpush1.msra.mxu0 %v500
        %683 = vmatprep.subr.mxu0 0.0
        %684 = vmatpush1.msra.mxu0 %v501
        %685 = vmatprep.subr.mxu0 0.0
        %686 = vmatpush1.msra.mxu0 %v502
        %687 = vmatprep.subr.mxu0 0.0
        %688 = vmatpush1.msra.mxu0 %v503
        %689 = vmatprep.subr.mxu0 0.0
        %690 = vmatpush1.msra.mxu0 0.0
        %691 = vmatprep.subr.mxu0 0.0
        %692 = vmatpush1.msra.mxu0 0.0
        %693 = vmatprep.subr.mxu0 0.0
        %694 = vmatpush1.msra.mxu0 0.0
        %695 = vmatprep.subr.mxu0 0.0
        %696 = vmatpush1.msra.mxu0 0.0
        %697 = vmatprep.subr.mxu0 0.0
        %698 = vmatpush1.msra.mxu0 0.0
        %699 = vmatprep.subr.mxu0 0.0
        %700 = vmatpush1.msra.mxu0 0.0
        %701 = vmatprep.subr.mxu0 0.0
        %702 = vmatpush1.msra.mxu0 0.0
        %703 = vmatprep.subr.mxu0 0.0
        %704 = vmatpush1.msra.mxu0 0.0
        %705 = vmatprep.subr.mxu0 0.0
        %706 = vmatpush1.msra.mxu0 0.0
        %707 = vmatprep.subr.mxu0 0.0
        %708 = vmatpush1.msra.mxu0 0.0
        %709 = vmatprep.subr.mxu0 0.0
        %710 = vmatpush1.msra.mxu0 0.0
        %711 = vmatprep.subr.mxu0 0.0
        %712 = vmatpush1.msra.mxu0 0.0
        %713 = vmatprep.subr.mxu0 0.0
        %714 = vmatpush1.msra.mxu0 0.0
        %715 = vmatprep.subr.mxu0 0.0
        %716 = vmatpush1.msra.mxu0 0.0
        %717 = vmatprep.subr.mxu0 0.0
        %718 = vmatpush1.msra.mxu0 0.0
        %719 = vmatprep.subr.mxu0 0.0
        %720 = vmatpush1.msra.mxu0 0.0
        %721 = vmatprep.subr.mxu0 0.0
        %722 = vmatpush1.msra.mxu0 0.0
        %723 = vmatprep.subr.mxu0 0.0
        %724 = vmatpush1.msra.mxu0 0.0
        %725 = vmatprep.subr.mxu0 0.0
        %726 = vmatpush1.msra.mxu0 0.0
        %727 = vmatprep.subr.mxu0 0.0
        %728 = vmatpush1.msra.mxu0 0.0
        %729 = vmatprep.subr.mxu0 0.0
        %730 = vmatpush1.msra.mxu0 0.0
        %731 = vmatprep.subr.mxu0 0.0
        %732 = vmatpush1.msra.mxu0 0.0
        %733 = vmatprep.subr.mxu0 0.0
        %734 = vmatpush1.msra.mxu0 0.0
        %735 = vmatprep.subr.mxu0 0.0
        %736 = vmatpush1.msra.mxu0 0.0
        %737 = vmatprep.subr.mxu0 0.0
        %738 = vmatpush1.msra.mxu0 0.0
        %739 = vmatprep.subr.mxu0 0.0
        %740 = vmatpush1.msra.mxu0 0.0
        %741 = vmatprep.subr.mxu0 0.0
        %742 = vmatpush1.msra.mxu0 0.0
        %743 = vmatprep.subr.mxu0 0.0
        %744 = vmatpush1.msra.mxu0 0.0
        %745 = vmatprep.mubr.f32.mxu0 0.0
        %746 = vmatmul.mubr.f32.gmra.mrb[0].mxu0 %v679
        %v747 = vpop.f32.mrb[0].mxu0
        %v748 = vadd.f32 %v516, %v747
        %v749 = vpop.f32.mrb[0].mxu0
        %750 = vdwg.mxu0
        %vm751 = vcmask 25600
        %752 = vst.msk [vmem:[%s494] sm:$0x3] %vm751, %v748
        %v753 = vld [vmem:[%s468] sm:$0xff]
        %v754 = vld [vmem:[%s468 + $0x8] sm:$0xff]
        %v755 = vld [vmem:[%s468 + $0x10] sm:$0xff]
        %v756 = vld [vmem:[%s468 + $0x18] sm:$0xff]
        %v757 = vld [vmem:[%s402] sm:$0x1]
        %v759 = vlaneseq
        %v760 = vshrl.u32 %v759, 7
        %v761 = vsub.s32 0, %v760
        %v762 = vrot.slane %v757, %v761
        %764 = vmatprep.subr.mxu0 0.0
        %765 = vmatpush1.msra.mxu0 %v753
        %766 = vmatprep.subr.mxu0 0.0
        %767 = vmatpush1.msra.mxu0 %v754
        %768 = vmatprep.subr.mxu0 0.0
        %769 = vmatpush1.msra.mxu0 %v755
        %770 = vmatprep.subr.mxu0 0.0
        %771 = vmatpush1.msra.mxu0 %v756
        %772 = vmatprep.subr.mxu0 0.0
        %773 = vmatpush1.msra.mxu0 0.0
        %774 = vmatprep.subr.mxu0 0.0
        %775 = vmatpush1.msra.mxu0 0.0
        %776 = vmatprep.subr.mxu0 0.0
        %777 = vmatpush1.msra.mxu0 0.0
        %778 = vmatprep.subr.mxu0 0.0
        %779 = vmatpush1.msra.mxu0 0.0
        %780 = vmatprep.subr.mxu0 0.0
        %781 = vmatpush1.msra.mxu0 0.0
        %782 = vmatprep.subr.mxu0 0.0
        %783 = vmatpush1.msra.mxu0 0.0
        %784 = vmatprep.subr.mxu0 0.0
        %785 = vmatpush1.msra.mxu0 0.0
        %786 = vmatprep.subr.mxu0 0.0
        %787 = vmatpush1.msra.mxu0 0.0
        %788 = vmatprep.subr.mxu0 0.0
        %789 = vmatpush1.msra.mxu0 0.0
        %790 = vmatprep.subr.mxu0 0.0
        %791 = vmatpush1.msra.mxu0 0.0
        %792 = vmatprep.subr.mxu0 0.0
        %793 = vmatpush1.msra.mxu0 0.0
        %794 = vmatprep.subr.mxu0 0.0
        %795 = vmatpush1.msra.mxu0 0.0
        %796 = vmatprep.subr.mxu0 0.0
        %797 = vmatpush1.msra.mxu0 0.0
        %798 = vmatprep.subr.mxu0 0.0
        %799 = vmatpush1.msra.mxu0 0.0
        %800 = vmatprep.subr.mxu0 0.0
        %801 = vmatpush1.msra.mxu0 0.0
        %802 = vmatprep.subr.mxu0 0.0
        %803 = vmatpush1.msra.mxu0 0.0
        %804 = vmatprep.subr.mxu0 0.0
        %805 = vmatpush1.msra.mxu0 0.0
        %806 = vmatprep.subr.mxu0 0.0
        %807 = vmatpush1.msra.mxu0 0.0
        %808 = vmatprep.subr.mxu0 0.0
        %809 = vmatpush1.msra.mxu0 0.0
        %810 = vmatprep.subr.mxu0 0.0
        %811 = vmatpush1.msra.mxu0 0.0
        %812 = vmatprep.subr.mxu0 0.0
        %813 = vmatpush1.msra.mxu0 0.0
        %814 = vmatprep.subr.mxu0 0.0
        %815 = vmatpush1.msra.mxu0 0.0
        %816 = vmatprep.subr.mxu0 0.0
        %817 = vmatpush1.msra.mxu0 0.0
        %818 = vmatprep.subr.mxu0 0.0
        %819 = vmatpush1.msra.mxu0 0.0
        %820 = vmatprep.subr.mxu0 0.0
        %821 = vmatpush1.msra.mxu0 0.0
        %822 = vmatprep.subr.mxu0 0.0
        %823 = vmatpush1.msra.mxu0 0.0
        %824 = vmatprep.subr.mxu0 0.0
        %825 = vmatpush1.msra.mxu0 0.0
        %826 = vmatprep.subr.mxu0 0.0
        %827 = vmatpush1.msra.mxu0 0.0
        %828 = vmatprep.mubr.f32.mxu0 0.0
        %829 = vmatmul.mubr.f32.gmra.mrb[0].mxu0 %v531
        %v830 = vpop.f32.mrb[0].mxu0
        %v831 = vadd.f32 %v762, %v830
        %v832 = vpop.f32.mrb[0].mxu0
        %833 = vdwg.mxu0
        %v834 = vld [vmem:[%s473] sm:$0xff]
        %v835 = vld [vmem:[%s473 + $0x8] sm:$0xff]
        %v836 = vld [vmem:[%s473 + $0x10] sm:$0xff]
        %v837 = vld [vmem:[%s473 + $0x18] sm:$0xff]
        %v838 = vld [vmem:[%s473 + $0x20] sm:$0xf]
        %840 = vrot.lane.b32.xlu0 %v748, 32
        %v841 = vpop.permute.xlu0 %840
        %v843 = vsel %vm529, %v677, %v841
        %vm844 = vcmask 293888
        %v846 = vsel %vm844, %v843, 0
        %vm848 = vcmask 1043456
        %v850 = vsel %vm848, %v838, 0
        %852 = vmatprep.subr.mxu0 0.0
        %853 = vmatpush1.msra.mxu0 %v834
        %854 = vmatprep.subr.mxu0 0.0
        %855 = vmatpush1.msra.mxu0 %v835
        %856 = vmatprep.subr.mxu0 0.0
        %857 = vmatpush1.msra.mxu0 %v836
        %858 = vmatprep.subr.mxu0 0.0
        %859 = vmatpush1.msra.mxu0 %v837
        %860 = vmatprep.subr.mxu0 0.0
        %861 = vmatpush1.msra.mxu0 %v850
        %862 = vmatprep.subr.mxu0 0.0
        %863 = vmatpush1.msra.mxu0 0.0
        %864 = vmatprep.subr.mxu0 0.0
        %865 = vmatpush1.msra.mxu0 0.0
        %866 = vmatprep.subr.mxu0 0.0
        %867 = vmatpush1.msra.mxu0 0.0
        %868 = vmatprep.subr.mxu0 0.0
        %869 = vmatpush1.msra.mxu0 0.0
        %870 = vmatprep.subr.mxu0 0.0
        %871 = vmatpush1.msra.mxu0 0.0
        %872 = vmatprep.subr.mxu0 0.0
        %873 = vmatpush1.msra.mxu0 0.0
        %874 = vmatprep.subr.mxu0 0.0
        %875 = vmatpush1.msra.mxu0 0.0
        %876 = vmatprep.subr.mxu0 0.0
        %877 = vmatpush1.msra.mxu0 0.0
        %878 = vmatprep.subr.mxu0 0.0
        %879 = vmatpush1.msra.mxu0 0.0
        %880 = vmatprep.subr.mxu0 0.0
        %881 = vmatpush1.msra.mxu0 0.0
        %882 = vmatprep.subr.mxu0 0.0
        %883 = vmatpush1.msra.mxu0 0.0
        %884 = vmatprep.subr.mxu0 0.0
        %885 = vmatpush1.msra.mxu0 0.0
        %886 = vmatprep.subr.mxu0 0.0
        %887 = vmatpush1.msra.mxu0 0.0
        %888 = vmatprep.subr.mxu0 0.0
        %889 = vmatpush1.msra.mxu0 0.0
        %890 = vmatprep.subr.mxu0 0.0
        %891 = vmatpush1.msra.mxu0 0.0
        %892 = vmatprep.subr.mxu0 0.0
        %893 = vmatpush1.msra.mxu0 0.0
        %894 = vmatprep.subr.mxu0 0.0
        %895 = vmatpush1.msra.mxu0 0.0
        %896 = vmatprep.subr.mxu0 0.0
        %897 = vmatpush1.msra.mxu0 0.0
        %898 = vmatprep.subr.mxu0 0.0
        %899 = vmatpush1.msra.mxu0 0.0
        %900 = vmatprep.subr.mxu0 0.0
        %901 = vmatpush1.msra.mxu0 0.0
        %902 = vmatprep.subr.mxu0 0.0
        %903 = vmatpush1.msra.mxu0 0.0
        %904 = vmatprep.subr.mxu0 0.0
        %905 = vmatpush1.msra.mxu0 0.0
        %906 = vmatprep.subr.mxu0 0.0
        %907 = vmatpush1.msra.mxu0 0.0
        %908 = vmatprep.subr.mxu0 0.0
        %909 = vmatpush1.msra.mxu0 0.0
        %910 = vmatprep.subr.mxu0 0.0
        %911 = vmatpush1.msra.mxu0 0.0
        %912 = vmatprep.subr.mxu0 0.0
        %913 = vmatpush1.msra.mxu0 0.0
        %914 = vmatprep.subr.mxu0 0.0
        %915 = vmatpush1.msra.mxu0 0.0
        %916 = vmatprep.mubr.f32.mxu0 0.0
        %917 = vmatmul.mubr.f32.gmra.mrb[0].mxu0 %v846
        %v918 = vpop.f32.mrb[0].mxu0
        %v919 = vadd.f32 0.0, %v918
        %v920 = vpop.f32.mrb[0].mxu0
        %921 = vdwg.mxu0
        %v922 = vadd.f32 %v831, %v919
        %v923 = vmax.f32 %v922, 0.0
        %v925 = vsel %vm529, %v923, 0
        %927 = vmatprep.subr.mxu0 0.0
        %928 = vmatpush1.msra.mxu0 %v496
        %929 = vmatprep.subr.mxu0 0.0
        %930 = vmatpush1.msra.mxu0 %v497
        %931 = vmatprep.subr.mxu0 0.0
        %932 = vmatpush1.msra.mxu0 %v498
        %933 = vmatprep.subr.mxu0 0.0
        %934 = vmatpush1.msra.mxu0 %v499
        %935 = vmatprep.subr.mxu0 0.0
        %936 = vmatpush1.msra.mxu0 0.0
        %937 = vmatprep.subr.mxu0 0.0
        %938 = vmatpush1.msra.mxu0 0.0
        %939 = vmatprep.subr.mxu0 0.0
        %940 = vmatpush1.msra.mxu0 0.0
        %941 = vmatprep.subr.mxu0 0.0
        %942 = vmatpush1.msra.mxu0 0.0
        %943 = vmatprep.subr.mxu0 0.0
        %944 = vmatpush1.msra.mxu0 0.0
        %945 = vmatprep.subr.mxu0 0.0
        %946 = vmatpush1.msra.mxu0 0.0
        %947 = vmatprep.subr.mxu0 0.0
        %948 = vmatpush1.msra.mxu0 0.0
        %949 = vmatprep.subr.mxu0 0.0
        %950 = vmatpush1.msra.mxu0 0.0
        %951 = vmatprep.subr.mxu0 0.0
        %952 = vmatpush1.msra.mxu0 0.0
        %953 = vmatprep.subr.mxu0 0.0
        %954 = vmatpush1.msra.mxu0 0.0
        %955 = vmatprep.subr.mxu0 0.0
        %956 = vmatpush1.msra.mxu0 0.0
        %957 = vmatprep.subr.mxu0 0.0
        %958 = vmatpush1.msra.mxu0 0.0
        %959 = vmatprep.subr.mxu0 0.0
        %960 = vmatpush1.msra.mxu0 0.0
        %961 = vmatprep.subr.mxu0 0.0
        %962 = vmatpush1.msra.mxu0 0.0
        %963 = vmatprep.subr.mxu0 0.0
        %964 = vmatpush1.msra.mxu0 0.0
        %965 = vmatprep.subr.mxu0 0.0
        %966 = vmatpush1.msra.mxu0 0.0
        %967 = vmatprep.subr.mxu0 0.0
        %968 = vmatpush1.msra.mxu0 0.0
        %969 = vmatprep.subr.mxu0 0.0
        %970 = vmatpush1.msra.mxu0 0.0
        %971 = vmatprep.subr.mxu0 0.0
        %972 = vmatpush1.msra.mxu0 0.0
        %973 = vmatprep.subr.mxu0 0.0
        %974 = vmatpush1.msra.mxu0 0.0
        %975 = vmatprep.subr.mxu0 0.0
        %976 = vmatpush1.msra.mxu0 0.0
        %977 = vmatprep.subr.mxu0 0.0
        %978 = vmatpush1.msra.mxu0 0.0
        %979 = vmatprep.subr.mxu0 0.0
        %980 = vmatpush1.msra.mxu0 0.0
        %981 = vmatprep.subr.mxu0 0.0
        %982 = vmatpush1.msra.mxu0 0.0
        %983 = vmatprep.subr.mxu0 0.0
        %984 = vmatpush1.msra.mxu0 0.0
        %985 = vmatprep.subr.mxu0 0.0
        %986 = vmatpush1.msra.mxu0 0.0
        %987 = vmatprep.subr.mxu0 0.0
        %988 = vmatpush1.msra.mxu0 0.0
        %989 = vmatprep.subr.mxu0 0.0
        %990 = vmatpush1.msra.mxu0 0.0
        %991 = vmatprep.mubr.f32.mxu0 0.0
        %992 = vmatmul.mubr.f32.gmra.mrb[0].mxu0 %v925
        %v993 = vpop.f32.mrb[0].mxu0
        %v994 = vadd.f32 %v509, %v993
        %v995 = vpop.f32.mrb[0].mxu0
        %996 = vdwg.mxu0
        %v997 = vmax.f32 %v994, 0.0
        %v999 = vsel %vm529, %v997, 0
        %1001 = vmatprep.subr.mxu0 0.0
        %1002 = vmatpush1.msra.mxu0 %v500
        %1003 = vmatprep.subr.mxu0 0.0
        %1004 = vmatpush1.msra.mxu0 %v501
        %1005 = vmatprep.subr.mxu0 0.0
        %1006 = vmatpush1.msra.mxu0 %v502
        %1007 = vmatprep.subr.mxu0 0.0
        %1008 = vmatpush1.msra.mxu0 %v503
        %1009 = vmatprep.subr.mxu0 0.0
        %1010 = vmatpush1.msra.mxu0 0.0
        %1011 = vmatprep.subr.mxu0 0.0
        %1012 = vmatpush1.msra.mxu0 0.0
        %1013 = vmatprep.subr.mxu0 0.0
        %1014 = vmatpush1.msra.mxu0 0.0
        %1015 = vmatprep.subr.mxu0 0.0
        %1016 = vmatpush1.msra.mxu0 0.0
        %1017 = vmatprep.subr.mxu0 0.0
        %1018 = vmatpush1.msra.mxu0 0.0
        %1019 = vmatprep.subr.mxu0 0.0
        %1020 = vmatpush1.msra.mxu0 0.0
        %1021 = vmatprep.subr.mxu0 0.0
        %1022 = vmatpush1.msra.mxu0 0.0
        %1023 = vmatprep.subr.mxu0 0.0
        %1024 = vmatpush1.msra.mxu0 0.0
        %1025 = vmatprep.subr.mxu0 0.0
        %1026 = vmatpush1.msra.mxu0 0.0
        %1027 = vmatprep.subr.mxu0 0.0
        %1028 = vmatpush1.msra.mxu0 0.0
        %1029 = vmatprep.subr.mxu0 0.0
        %1030 = vmatpush1.msra.mxu0 0.0
        %1031 = vmatprep.subr.mxu0 0.0
        %1032 = vmatpush1.msra.mxu0 0.0
        %1033 = vmatprep.subr.mxu0 0.0
        %1034 = vmatpush1.msra.mxu0 0.0
        %1035 = vmatprep.subr.mxu0 0.0
        %1036 = vmatpush1.msra.mxu0 0.0
        %1037 = vmatprep.subr.mxu0 0.0
        %1038 = vmatpush1.msra.mxu0 0.0
        %1039 = vmatprep.subr.mxu0 0.0
        %1040 = vmatpush1.msra.mxu0 0.0
        %1041 = vmatprep.subr.mxu0 0.0
        %1042 = vmatpush1.msra.mxu0 0.0
        %1043 = vmatprep.subr.mxu0 0.0
        %1044 = vmatpush1.msra.mxu0 0.0
        %1045 = vmatprep.subr.mxu0 0.0
        %1046 = vmatpush1.msra.mxu0 0.0
        %1047 = vmatprep.subr.mxu0 0.0
        %1048 = vmatpush1.msra.mxu0 0.0
        %1049 = vmatprep.subr.mxu0 0.0
        %1050 = vmatpush1.msra.mxu0 0.0
        %1051 = vmatprep.subr.mxu0 0.0
        %1052 = vmatpush1.msra.mxu0 0.0
        %1053 = vmatprep.subr.mxu0 0.0
        %1054 = vmatpush1.msra.mxu0 0.0
        %1055 = vmatprep.subr.mxu0 0.0
        %1056 = vmatpush1.msra.mxu0 0.0
        %1057 = vmatprep.subr.mxu0 0.0
        %1058 = vmatpush1.msra.mxu0 0.0
        %1059 = vmatprep.subr.mxu0 0.0
        %1060 = vmatpush1.msra.mxu0 0.0
        %1061 = vmatprep.subr.mxu0 0.0
        %1062 = vmatpush1.msra.mxu0 0.0
        %1063 = vmatprep.subr.mxu0 0.0
        %1064 = vmatpush1.msra.mxu0 0.0
        %1065 = vmatprep.mubr.f32.mxu0 0.0
        %1066 = vmatmul.mubr.f32.gmra.mrb[0].mxu0 %v999
        %v1067 = vpop.f32.mrb[0].mxu0
        %v1068 = vadd.f32 %v516, %v1067
        %v1069 = vpop.f32.mrb[0].mxu0
        %1070 = vdwg.mxu0
        %s1071 = scalar_lea.vmem %s494, 2
        %1072 = vst.msk [vmem:[%s1071] sm:$0x3] %vm751, %v1068
        %1074 = vrot.lane.b32.xlu0 %v1068, 32
        %v1075 = vpop.permute.xlu0 %1074
        %v1077 = vsel %vm529, %v997, %v1075
        %v1079 = vsel %vm844, %v1077, 0
        %1081 = vmatprep.subr.mxu0 0.0
        %1082 = vmatpush1.msra.mxu0 %v834
        %1083 = vmatprep.subr.mxu0 0.0
        %1084 = vmatpush1.msra.mxu0 %v835
        %1085 = vmatprep.subr.mxu0 0.0
        %1086 = vmatpush1.msra.mxu0 %v836
        %1087 = vmatprep.subr.mxu0 0.0
        %1088 = vmatpush1.msra.mxu0 %v837
        %1089 = vmatprep.subr.mxu0 0.0
        %1090 = vmatpush1.msra.mxu0 %v850
        %1091 = vmatprep.subr.mxu0 0.0
        %1092 = vmatpush1.msra.mxu0 0.0
        %1093 = vmatprep.subr.mxu0 0.0
        %1094 = vmatpush1.msra.mxu0 0.0
        %1095 = vmatprep.subr.mxu0 0.0
        %1096 = vmatpush1.msra.mxu0 0.0
        %1097 = vmatprep.subr.mxu0 0.0
        %1098 = vmatpush1.msra.mxu0 0.0
        %1099 = vmatprep.subr.mxu0 0.0
        %1100 = vmatpush1.msra.mxu0 0.0
        %1101 = vmatprep.subr.mxu0 0.0
        %1102 = vmatpush1.msra.mxu0 0.0
        %1103 = vmatprep.subr.mxu0 0.0
        %1104 = vmatpush1.msra.mxu0 0.0
        %1105 = vmatprep.subr.mxu0 0.0
        %1106 = vmatpush1.msra.mxu0 0.0
        %1107 = vmatprep.subr.mxu0 0.0
        %1108 = vmatpush1.msra.mxu0 0.0
        %1109 = vmatprep.subr.mxu0 0.0
        %1110 = vmatpush1.msra.mxu0 0.0
        %1111 = vmatprep.subr.mxu0 0.0
        %1112 = vmatpush1.msra.mxu0 0.0
        %1113 = vmatprep.subr.mxu0 0.0
        %1114 = vmatpush1.msra.mxu0 0.0
        %1115 = vmatprep.subr.mxu0 0.0
        %1116 = vmatpush1.msra.mxu0 0.0
        %1117 = vmatprep.subr.mxu0 0.0
        %1118 = vmatpush1.msra.mxu0 0.0
        %1119 = vmatprep.subr.mxu0 0.0
        %1120 = vmatpush1.msra.mxu0 0.0
        %1121 = vmatprep.subr.mxu0 0.0
        %1122 = vmatpush1.msra.mxu0 0.0
        %1123 = vmatprep.subr.mxu0 0.0
        %1124 = vmatpush1.msra.mxu0 0.0
        %1125 = vmatprep.subr.mxu0 0.0
        %1126 = vmatpush1.msra.mxu0 0.0
        %1127 = vmatprep.subr.mxu0 0.0
        %1128 = vmatpush1.msra.mxu0 0.0
        %1129 = vmatprep.subr.mxu0 0.0
        %1130 = vmatpush1.msra.mxu0 0.0
        %1131 = vmatprep.subr.mxu0 0.0
        %1132 = vmatpush1.msra.mxu0 0.0
        %1133 = vmatprep.subr.mxu0 0.0
        %1134 = vmatpush1.msra.mxu0 0.0
        %1135 = vmatprep.subr.mxu0 0.0
        %1136 = vmatpush1.msra.mxu0 0.0
        %1137 = vmatprep.subr.mxu0 0.0
        %1138 = vmatpush1.msra.mxu0 0.0
        %1139 = vmatprep.subr.mxu0 0.0
        %1140 = vmatpush1.msra.mxu0 0.0
        %1141 = vmatprep.subr.mxu0 0.0
        %1142 = vmatpush1.msra.mxu0 0.0
        %1143 = vmatprep.subr.mxu0 0.0
        %1144 = vmatpush1.msra.mxu0 0.0
        %1145 = vmatprep.mubr.f32.mxu0 0.0
        %1146 = vmatmul.mubr.f32.gmra.mrb[0].mxu0 %v1079
        %v1147 = vpop.f32.mrb[0].mxu0
        %v1148 = vadd.f32 0.0, %v1147
        %v1149 = vpop.f32.mrb[0].mxu0
        %1150 = vdwg.mxu0
        %v1151 = vadd.f32 %v831, %v1148
        %v1152 = vmax.f32 %v1151, 0.0
        %v1154 = vsel %vm529, %v1152, 0
        %1156 = vmatprep.subr.mxu0 0.0
        %1157 = vmatpush1.msra.mxu0 %v496
        %1158 = vmatprep.subr.mxu0 0.0
        %1159 = vmatpush1.msra.mxu0 %v497
        %1160 = vmatprep.subr.mxu0 0.0
        %1161 = vmatpush1.msra.mxu0 %v498
        %1162 = vmatprep.subr.mxu0 0.0
        %1163 = vmatpush1.msra.mxu0 %v499
        %1164 = vmatprep.subr.mxu0 0.0
        %1165 = vmatpush1.msra.mxu0 0.0
        %1166 = vmatprep.subr.mxu0 0.0
        %1167 = vmatpush1.msra.mxu0 0.0
        %1168 = vmatprep.subr.mxu0 0.0
        %1169 = vmatpush1.msra.mxu0 0.0
        %1170 = vmatprep.subr.mxu0 0.0
        %1171 = vmatpush1.msra.mxu0 0.0
        %1172 = vmatprep.subr.mxu0 0.0
        %1173 = vmatpush1.msra.mxu0 0.0
        %1174 = vmatprep.subr.mxu0 0.0
        %1175 = vmatpush1.msra.mxu0 0.0
        %1176 = vmatprep.subr.mxu0 0.0
        %1177 = vmatpush1.msra.mxu0 0.0
        %1178 = vmatprep.subr.mxu0 0.0
        %1179 = vmatpush1.msra.mxu0 0.0
        %1180 = vmatprep.subr.mxu0 0.0
        %1181 = vmatpush1.msra.mxu0 0.0
        %1182 = vmatprep.subr.mxu0 0.0
        %1183 = vmatpush1.msra.mxu0 0.0
        %1184 = vmatprep.subr.mxu0 0.0
        %1185 = vmatpush1.msra.mxu0 0.0
        %1186 = vmatprep.subr.mxu0 0.0
        %1187 = vmatpush1.msra.mxu0 0.0
        %1188 = vmatprep.subr.mxu0 0.0
        %1189 = vmatpush1.msra.mxu0 0.0
        %1190 = vmatprep.subr.mxu0 0.0
        %1191 = vmatpush1.msra.mxu0 0.0
        %1192 = vmatprep.subr.mxu0 0.0
        %1193 = vmatpush1.msra.mxu0 0.0
        %1194 = vmatprep.subr.mxu0 0.0
        %1195 = vmatpush1.msra.mxu0 0.0
        %1196 = vmatprep.subr.mxu0 0.0
        %1197 = vmatpush1.msra.mxu0 0.0
        %1198 = vmatprep.subr.mxu0 0.0
        %1199 = vmatpush1.msra.mxu0 0.0
        %1200 = vmatprep.subr.mxu0 0.0
        %1201 = vmatpush1.msra.mxu0 0.0
        %1202 = vmatprep.subr.mxu0 0.0
        %1203 = vmatpush1.msra.mxu0 0.0
        %1204 = vmatprep.subr.mxu0 0.0
        %1205 = vmatpush1.msra.mxu0 0.0
        %1206 = vmatprep.subr.mxu0 0.0
        %1207 = vmatpush1.msra.mxu0 0.0
        %1208 = vmatprep.subr.mxu0 0.0
        %1209 = vmatpush1.msra.mxu0 0.0
        %1210 = vmatprep.subr.mxu0 0.0
        %1211 = vmatpush1.msra.mxu0 0.0
        %1212 = vmatprep.subr.mxu0 0.0
        %1213 = vmatpush1.msra.mxu0 0.0
        %1214 = vmatprep.subr.mxu0 0.0
        %1215 = vmatpush1.msra.mxu0 0.0
        %1216 = vmatprep.subr.mxu0 0.0
        %1217 = vmatpush1.msra.mxu0 0.0
        %1218 = vmatprep.subr.mxu0 0.0
        %1219 = vmatpush1.msra.mxu0 0.0
        %1220 = vmatprep.mubr.f32.mxu0 0.0
        %1221 = vmatmul.mubr.f32.gmra.mrb[0].mxu0 %v1154
        %v1222 = vpop.f32.mrb[0].mxu0
        %v1223 = vadd.f32 %v509, %v1222
        %v1224 = vpop.f32.mrb[0].mxu0
        %1225 = vdwg.mxu0
        %v1226 = vmax.f32 %v1223, 0.0
        %v1228 = vsel %vm529, %v1226, 0
        %1230 = vmatprep.subr.mxu0 0.0
        %1231 = vmatpush1.msra.mxu0 %v500
        %1232 = vmatprep.subr.mxu0 0.0
        %1233 = vmatpush1.msra.mxu0 %v501
        %1234 = vmatprep.subr.mxu0 0.0
        %1235 = vmatpush1.msra.mxu0 %v502
        %1236 = vmatprep.subr.mxu0 0.0
        %1237 = vmatpush1.msra.mxu0 %v503
        %1238 = vmatprep.subr.mxu0 0.0
        %1239 = vmatpush1.msra.mxu0 0.0
        %1240 = vmatprep.subr.mxu0 0.0
        %1241 = vmatpush1.msra.mxu0 0.0
        %1242 = vmatprep.subr.mxu0 0.0
        %1243 = vmatpush1.msra.mxu0 0.0
        %1244 = vmatprep.subr.mxu0 0.0
        %1245 = vmatpush1.msra.mxu0 0.0
        %1246 = vmatprep.subr.mxu0 0.0
        %1247 = vmatpush1.msra.mxu0 0.0
        %1248 = vmatprep.subr.mxu0 0.0
        %1249 = vmatpush1.msra.mxu0 0.0
        %1250 = vmatprep.subr.mxu0 0.0
        %1251 = vmatpush1.msra.mxu0 0.0
        %1252 = vmatprep.subr.mxu0 0.0
        %1253 = vmatpush1.msra.mxu0 0.0
        %1254 = vmatprep.subr.mxu0 0.0
        %1255 = vmatpush1.msra.mxu0 0.0
        %1256 = vmatprep.subr.mxu0 0.0
        %1257 = vmatpush1.msra.mxu0 0.0
        %1258 = vmatprep.subr.mxu0 0.0
        %1259 = vmatpush1.msra.mxu0 0.0
        %1260 = vmatprep.subr.mxu0 0.0
        %1261 = vmatpush1.msra.mxu0 0.0
        %1262 = vmatprep.subr.mxu0 0.0
        %1263 = vmatpush1.msra.mxu0 0.0
        %1264 = vmatprep.subr.mxu0 0.0
        %1265 = vmatpush1.msra.mxu0 0.0
        %1266 = vmatprep.subr.mxu0 0.0
        %1267 = vmatpush1.msra.mxu0 0.0
        %1268 = vmatprep.subr.mxu0 0.0
        %1269 = vmatpush1.msra.mxu0 0.0
        %1270 = vmatprep.subr.mxu0 0.0
        %1271 = vmatpush1.msra.mxu0 0.0
        %1272 = vmatprep.subr.mxu0 0.0
        %1273 = vmatpush1.msra.mxu0 0.0
        %1274 = vmatprep.subr.mxu0 0.0
        %1275 = vmatpush1.msra.mxu0 0.0
        %1276 = vmatprep.subr.mxu0 0.0
        %1277 = vmatpush1.msra.mxu0 0.0
        %1278 = vmatprep.subr.mxu0 0.0
        %1279 = vmatpush1.msra.mxu0 0.0
        %1280 = vmatprep.subr.mxu0 0.0
        %1281 = vmatpush1.msra.mxu0 0.0
        %1282 = vmatprep.subr.mxu0 0.0
        %1283 = vmatpush1.msra.mxu0 0.0
        %1284 = vmatprep.subr.mxu0 0.0
        %1285 = vmatpush1.msra.mxu0 0.0
        %1286 = vmatprep.subr.mxu0 0.0
        %1287 = vmatpush1.msra.mxu0 0.0
        %1288 = vmatprep.subr.mxu0 0.0
        %1289 = vmatpush1.msra.mxu0 0.0
        %1290 = vmatprep.subr.mxu0 0.0
        %1291 = vmatpush1.msra.mxu0 0.0
        %1292 = vmatprep.subr.mxu0 0.0
        %1293 = vmatpush1.msra.mxu0 0.0
        %1294 = vmatprep.mubr.f32.mxu0 0.0
        %1295 = vmatmul.mubr.f32.gmra.mrb[0].mxu0 %v1228
        %v1296 = vpop.f32.mrb[0].mxu0
        %v1297 = vadd.f32 %v516, %v1296
        %v1298 = vpop.f32.mrb[0].mxu0
        %1299 = vdwg.mxu0
        %s1300 = scalar_lea.vmem %s494, 4
        %1301 = vst.msk [vmem:[%s1300] sm:$0x3] %vm751, %v1297
        %1303 = vrot.lane.b32.xlu0 %v1297, 32
        %v1304 = vpop.permute.xlu0 %1303
        %v1306 = vsel %vm529, %v1226, %v1304
        %v1308 = vsel %vm844, %v1306, 0
        %1310 = vmatprep.subr.mxu0 0.0
        %1311 = vmatpush1.msra.mxu0 %v834
        %1312 = vmatprep.subr.mxu0 0.0
        %1313 = vmatpush1.msra.mxu0 %v835
        %1314 = vmatprep.subr.mxu0 0.0
        %1315 = vmatpush1.msra.mxu0 %v836
        %1316 = vmatprep.subr.mxu0 0.0
        %1317 = vmatpush1.msra.mxu0 %v837
        %1318 = vmatprep.subr.mxu0 0.0
        %1319 = vmatpush1.msra.mxu0 %v850
        %1320 = vmatprep.subr.mxu0 0.0
        %1321 = vmatpush1.msra.mxu0 0.0
        %1322 = vmatprep.subr.mxu0 0.0
        %1323 = vmatpush1.msra.mxu0 0.0
        %1324 = vmatprep.subr.mxu0 0.0
        %1325 = vmatpush1.msra.mxu0 0.0
        %1326 = vmatprep.subr.mxu0 0.0
        %1327 = vmatpush1.msra.mxu0 0.0
        %1328 = vmatprep.subr.mxu0 0.0
        %1329 = vmatpush1.msra.mxu0 0.0
        %1330 = vmatprep.subr.mxu0 0.0
        %1331 = vmatpush1.msra.mxu0 0.0
        %1332 = vmatprep.subr.mxu0 0.0
        %1333 = vmatpush1.msra.mxu0 0.0
        %1334 = vmatprep.subr.mxu0 0.0
        %1335 = vmatpush1.msra.mxu0 0.0
        %1336 = vmatprep.subr.mxu0 0.0
        %1337 = vmatpush1.msra.mxu0 0.0
        %1338 = vmatprep.subr.mxu0 0.0
        %1339 = vmatpush1.msra.mxu0 0.0
        %1340 = vmatprep.subr.mxu0 0.0
        %1341 = vmatpush1.msra.mxu0 0.0
        %1342 = vmatprep.subr.mxu0 0.0
        %1343 = vmatpush1.msra.mxu0 0.0
        %1344 = vmatprep.subr.mxu0 0.0
        %1345 = vmatpush1.msra.mxu0 0.0
        %1346 = vmatprep.subr.mxu0 0.0
        %1347 = vmatpush1.msra.mxu0 0.0
        %1348 = vmatprep.subr.mxu0 0.0
        %1349 = vmatpush1.msra.mxu0 0.0
        %1350 = vmatprep.subr.mxu0 0.0
        %1351 = vmatpush1.msra.mxu0 0.0
        %1352 = vmatprep.subr.mxu0 0.0
        %1353 = vmatpush1.msra.mxu0 0.0
        %1354 = vmatprep.subr.mxu0 0.0
        %1355 = vmatpush1.msra.mxu0 0.0
        %1356 = vmatprep.subr.mxu0 0.0
        %1357 = vmatpush1.msra.mxu0 0.0
        %1358 = vmatprep.subr.mxu0 0.0
        %1359 = vmatpush1.msra.mxu0 0.0
        %1360 = vmatprep.subr.mxu0 0.0
        %1361 = vmatpush1.msra.mxu0 0.0
        %1362 = vmatprep.subr.mxu0 0.0
        %1363 = vmatpush1.msra.mxu0 0.0
        %1364 = vmatprep.subr.mxu0 0.0
        %1365 = vmatpush1.msra.mxu0 0.0
        %1366 = vmatprep.subr.mxu0 0.0
        %1367 = vmatpush1.msra.mxu0 0.0
        %1368 = vmatprep.subr.mxu0 0.0
        %1369 = vmatpush1.msra.mxu0 0.0
        %1370 = vmatprep.subr.mxu0 0.0
        %1371 = vmatpush1.msra.mxu0 0.0
        %1372 = vmatprep.subr.mxu0 0.0
        %1373 = vmatpush1.msra.mxu0 0.0
        %1374 = vmatprep.mubr.f32.mxu0 0.0
        %1375 = vmatmul.mubr.f32.gmra.mrb[0].mxu0 %v1308
        %v1376 = vpop.f32.mrb[0].mxu0
        %v1377 = vadd.f32 0.0, %v1376
        %v1378 = vpop.f32.mrb[0].mxu0
        %1379 = vdwg.mxu0
        %v1380 = vadd.f32 %v831, %v1377
        %v1381 = vmax.f32 %v1380, 0.0
        %v1383 = vsel %vm529, %v1381, 0
        %1385 = vmatprep.subr.mxu0 0.0
        %1386 = vmatpush1.msra.mxu0 %v496
        %1387 = vmatprep.subr.mxu0 0.0
        %1388 = vmatpush1.msra.mxu0 %v497
        %1389 = vmatprep.subr.mxu0 0.0
        %1390 = vmatpush1.msra.mxu0 %v498
        %1391 = vmatprep.subr.mxu0 0.0
        %1392 = vmatpush1.msra.mxu0 %v499
        %1393 = vmatprep.subr.mxu0 0.0
        %1394 = vmatpush1.msra.mxu0 0.0
        %1395 = vmatprep.subr.mxu0 0.0
        %1396 = vmatpush1.msra.mxu0 0.0
        %1397 = vmatprep.subr.mxu0 0.0
        %1398 = vmatpush1.msra.mxu0 0.0
        %1399 = vmatprep.subr.mxu0 0.0
        %1400 = vmatpush1.msra.mxu0 0.0
        %1401 = vmatprep.subr.mxu0 0.0
        %1402 = vmatpush1.msra.mxu0 0.0
        %1403 = vmatprep.subr.mxu0 0.0
        %1404 = vmatpush1.msra.mxu0 0.0
        %1405 = vmatprep.subr.mxu0 0.0
        %1406 = vmatpush1.msra.mxu0 0.0
        %1407 = vmatprep.subr.mxu0 0.0
        %1408 = vmatpush1.msra.mxu0 0.0
        %1409 = vmatprep.subr.mxu0 0.0
        %1410 = vmatpush1.msra.mxu0 0.0
        %1411 = vmatprep.subr.mxu0 0.0
        %1412 = vmatpush1.msra.mxu0 0.0
        %1413 = vmatprep.subr.mxu0 0.0
        %1414 = vmatpush1.msra.mxu0 0.0
        %1415 = vmatprep.subr.mxu0 0.0
        %1416 = vmatpush1.msra.mxu0 0.0
        %1417 = vmatprep.subr.mxu0 0.0
        %1418 = vmatpush1.msra.mxu0 0.0
        %1419 = vmatprep.subr.mxu0 0.0
        %1420 = vmatpush1.msra.mxu0 0.0
        %1421 = vmatprep.subr.mxu0 0.0
        %1422 = vmatpush1.msra.mxu0 0.0
        %1423 = vmatprep.subr.mxu0 0.0
        %1424 = vmatpush1.msra.mxu0 0.0
        %1425 = vmatprep.subr.mxu0 0.0
        %1426 = vmatpush1.msra.mxu0 0.0
        %1427 = vmatprep.subr.mxu0 0.0
        %1428 = vmatpush1.msra.mxu0 0.0
        %1429 = vmatprep.subr.mxu0 0.0
        %1430 = vmatpush1.msra.mxu0 0.0
        %1431 = vmatprep.subr.mxu0 0.0
        %1432 = vmatpush1.msra.mxu0 0.0
        %1433 = vmatprep.subr.mxu0 0.0
        %1434 = vmatpush1.msra.mxu0 0.0
        %1435 = vmatprep.subr.mxu0 0.0
        %1436 = vmatpush1.msra.mxu0 0.0
        %1437 = vmatprep.subr.mxu0 0.0
        %1438 = vmatpush1.msra.mxu0 0.0
        %1439 = vmatprep.subr.mxu0 0.0
        %1440 = vmatpush1.msra.mxu0 0.0
        %1441 = vmatprep.subr.mxu0 0.0
        %1442 = vmatpush1.msra.mxu0 0.0
        %1443 = vmatprep.subr.mxu0 0.0
        %1444 = vmatpush1.msra.mxu0 0.0
        %1445 = vmatprep.subr.mxu0 0.0
        %1446 = vmatpush1.msra.mxu0 0.0
        %1447 = vmatprep.subr.mxu0 0.0
        %1448 = vmatpush1.msra.mxu0 0.0
        %1449 = vmatprep.mubr.f32.mxu0 0.0
        %1450 = vmatmul.mubr.f32.gmra.mrb[0].mxu0 %v1383
        %v1451 = vpop.f32.mrb[0].mxu0
        %v1452 = vadd.f32 %v509, %v1451
        %v1453 = vpop.f32.mrb[0].mxu0
        %1454 = vdwg.mxu0
        %v1455 = vmax.f32 %v1452, 0.0
        %v1457 = vsel %vm529, %v1455, 0
        %1459 = vmatprep.subr.mxu0 0.0
        %1460 = vmatpush1.msra.mxu0 %v500
        %1461 = vmatprep.subr.mxu0 0.0
        %1462 = vmatpush1.msra.mxu0 %v501
        %1463 = vmatprep.subr.mxu0 0.0
        %1464 = vmatpush1.msra.mxu0 %v502
        %1465 = vmatprep.subr.mxu0 0.0
        %1466 = vmatpush1.msra.mxu0 %v503
        %1467 = vmatprep.subr.mxu0 0.0
        %1468 = vmatpush1.msra.mxu0 0.0
        %1469 = vmatprep.subr.mxu0 0.0
        %1470 = vmatpush1.msra.mxu0 0.0
        %1471 = vmatprep.subr.mxu0 0.0
        %1472 = vmatpush1.msra.mxu0 0.0
        %1473 = vmatprep.subr.mxu0 0.0
        %1474 = vmatpush1.msra.mxu0 0.0
        %1475 = vmatprep.subr.mxu0 0.0
        %1476 = vmatpush1.msra.mxu0 0.0
        %1477 = vmatprep.subr.mxu0 0.0
        %1478 = vmatpush1.msra.mxu0 0.0
        %1479 = vmatprep.subr.mxu0 0.0
        %1480 = vmatpush1.msra.mxu0 0.0
        %1481 = vmatprep.subr.mxu0 0.0
        %1482 = vmatpush1.msra.mxu0 0.0
        %1483 = vmatprep.subr.mxu0 0.0
        %1484 = vmatpush1.msra.mxu0 0.0
        %1485 = vmatprep.subr.mxu0 0.0
        %1486 = vmatpush1.msra.mxu0 0.0
        %1487 = vmatprep.subr.mxu0 0.0
        %1488 = vmatpush1.msra.mxu0 0.0
        %1489 = vmatprep.subr.mxu0 0.0
        %1490 = vmatpush1.msra.mxu0 0.0
        %1491 = vmatprep.subr.mxu0 0.0
        %1492 = vmatpush1.msra.mxu0 0.0
        %1493 = vmatprep.subr.mxu0 0.0
        %1494 = vmatpush1.msra.mxu0 0.0
        %1495 = vmatprep.subr.mxu0 0.0
        %1496 = vmatpush1.msra.mxu0 0.0
        %1497 = vmatprep.subr.mxu0 0.0
        %1498 = vmatpush1.msra.mxu0 0.0
        %1499 = vmatprep.subr.mxu0 0.0
        %1500 = vmatpush1.msra.mxu0 0.0
        %1501 = vmatprep.subr.mxu0 0.0
        %1502 = vmatpush1.msra.mxu0 0.0
        %1503 = vmatprep.subr.mxu0 0.0
        %1504 = vmatpush1.msra.mxu0 0.0
        %1505 = vmatprep.subr.mxu0 0.0
        %1506 = vmatpush1.msra.mxu0 0.0
        %1507 = vmatprep.subr.mxu0 0.0
        %1508 = vmatpush1.msra.mxu0 0.0
        %1509 = vmatprep.subr.mxu0 0.0
        %1510 = vmatpush1.msra.mxu0 0.0
        %1511 = vmatprep.subr.mxu0 0.0
        %1512 = vmatpush1.msra.mxu0 0.0
        %1513 = vmatprep.subr.mxu0 0.0
        %1514 = vmatpush1.msra.mxu0 0.0
        %1515 = vmatprep.subr.mxu0 0.0
        %1516 = vmatpush1.msra.mxu0 0.0
        %1517 = vmatprep.subr.mxu0 0.0
        %1518 = vmatpush1.msra.mxu0 0.0
        %1519 = vmatprep.subr.mxu0 0.0
        %1520 = vmatpush1.msra.mxu0 0.0
        %1521 = vmatprep.subr.mxu0 0.0
        %1522 = vmatpush1.msra.mxu0 0.0
        %1523 = vmatprep.mubr.f32.mxu0 0.0
        %1524 = vmatmul.mubr.f32.gmra.mrb[0].mxu0 %v1457
        %v1525 = vpop.f32.mrb[0].mxu0
        %v1526 = vadd.f32 %v516, %v1525
        %v1527 = vpop.f32.mrb[0].mxu0
        %1528 = vdwg.mxu0
        %s1529 = scalar_lea.vmem %s494, 6
        %1530 = vst.msk [vmem:[%s1529] sm:$0x3] %vm751, %v1526
        %1532 = vrot.lane.b32.xlu0 %v1526, 32
        %v1533 = vpop.permute.xlu0 %1532
        %v1535 = vsel %vm529, %v1455, %v1533
        %v1537 = vsel %vm844, %v1535, 0
        %1539 = vmatprep.subr.mxu0 0.0
        %1540 = vmatpush1.msra.mxu0 %v834
        %1541 = vmatprep.subr.mxu0 0.0
        %1542 = vmatpush1.msra.mxu0 %v835
        %1543 = vmatprep.subr.mxu0 0.0
        %1544 = vmatpush1.msra.mxu0 %v836
        %1545 = vmatprep.subr.mxu0 0.0
        %1546 = vmatpush1.msra.mxu0 %v837
        %1547 = vmatprep.subr.mxu0 0.0
        %1548 = vmatpush1.msra.mxu0 %v850
        %1549 = vmatprep.subr.mxu0 0.0
        %1550 = vmatpush1.msra.mxu0 0.0
        %1551 = vmatprep.subr.mxu0 0.0
        %1552 = vmatpush1.msra.mxu0 0.0
        %1553 = vmatprep.subr.mxu0 0.0
        %1554 = vmatpush1.msra.mxu0 0.0
        %1555 = vmatprep.subr.mxu0 0.0
        %1556 = vmatpush1.msra.mxu0 0.0
        %1557 = vmatprep.subr.mxu0 0.0
        %1558 = vmatpush1.msra.mxu0 0.0
        %1559 = vmatprep.subr.mxu0 0.0
        %1560 = vmatpush1.msra.mxu0 0.0
        %1561 = vmatprep.subr.mxu0 0.0
        %1562 = vmatpush1.msra.mxu0 0.0
        %1563 = vmatprep.subr.mxu0 0.0
        %1564 = vmatpush1.msra.mxu0 0.0
        %1565 = vmatprep.subr.mxu0 0.0
        %1566 = vmatpush1.msra.mxu0 0.0
        %1567 = vmatprep.subr.mxu0 0.0
        %1568 = vmatpush1.msra.mxu0 0.0
        %1569 = vmatprep.subr.mxu0 0.0
        %1570 = vmatpush1.msra.mxu0 0.0
        %1571 = vmatprep.subr.mxu0 0.0
        %1572 = vmatpush1.msra.mxu0 0.0
        %1573 = vmatprep.subr.mxu0 0.0
        %1574 = vmatpush1.msra.mxu0 0.0
        %1575 = vmatprep.subr.mxu0 0.0
        %1576 = vmatpush1.msra.mxu0 0.0
        %1577 = vmatprep.subr.mxu0 0.0
        %1578 = vmatpush1.msra.mxu0 0.0
        %1579 = vmatprep.subr.mxu0 0.0
        %1580 = vmatpush1.msra.mxu0 0.0
        %1581 = vmatprep.subr.mxu0 0.0
        %1582 = vmatpush1.msra.mxu0 0.0
        %1583 = vmatprep.subr.mxu0 0.0
        %1584 = vmatpush1.msra.mxu0 0.0
        %1585 = vmatprep.subr.mxu0 0.0
        %1586 = vmatpush1.msra.mxu0 0.0
        %1587 = vmatprep.subr.mxu0 0.0
        %1588 = vmatpush1.msra.mxu0 0.0
        %1589 = vmatprep.subr.mxu0 0.0
        %1590 = vmatpush1.msra.mxu0 0.0
        %1591 = vmatprep.subr.mxu0 0.0
        %1592 = vmatpush1.msra.mxu0 0.0
        %1593 = vmatprep.subr.mxu0 0.0
        %1594 = vmatpush1.msra.mxu0 0.0
        %1595 = vmatprep.subr.mxu0 0.0
        %1596 = vmatpush1.msra.mxu0 0.0
        %1597 = vmatprep.subr.mxu0 0.0
        %1598 = vmatpush1.msra.mxu0 0.0
        %1599 = vmatprep.subr.mxu0 0.0
        %1600 = vmatpush1.msra.mxu0 0.0
        %1601 = vmatprep.subr.mxu0 0.0
        %1602 = vmatpush1.msra.mxu0 0.0
        %1603 = vmatprep.mubr.f32.mxu0 0.0
        %1604 = vmatmul.mubr.f32.gmra.mrb[0].mxu0 %v1537
        %v1605 = vpop.f32.mrb[0].mxu0
        %v1606 = vadd.f32 0.0, %v1605
        %v1607 = vpop.f32.mrb[0].mxu0
        %1608 = vdwg.mxu0
        %v1609 = vadd.f32 %v831, %v1606
        %v1610 = vmax.f32 %v1609, 0.0
        %v1612 = vsel %vm529, %v1610, 0
        %1614 = vmatprep.subr.mxu0 0.0
        %1615 = vmatpush1.msra.mxu0 %v496
        %1616 = vmatprep.subr.mxu0 0.0
        %1617 = vmatpush1.msra.mxu0 %v497
        %1618 = vmatprep.subr.mxu0 0.0
        %1619 = vmatpush1.msra.mxu0 %v498
        %1620 = vmatprep.subr.mxu0 0.0
        %1621 = vmatpush1.msra.mxu0 %v499
        %1622 = vmatprep.subr.mxu0 0.0
        %1623 = vmatpush1.msra.mxu0 0.0
        %1624 = vmatprep.subr.mxu0 0.0
        %1625 = vmatpush1.msra.mxu0 0.0
        %1626 = vmatprep.subr.mxu0 0.0
        %1627 = vmatpush1.msra.mxu0 0.0
        %1628 = vmatprep.subr.mxu0 0.0
        %1629 = vmatpush1.msra.mxu0 0.0
        %1630 = vmatprep.subr.mxu0 0.0
        %1631 = vmatpush1.msra.mxu0 0.0
        %1632 = vmatprep.subr.mxu0 0.0
        %1633 = vmatpush1.msra.mxu0 0.0
        %1634 = vmatprep.subr.mxu0 0.0
        %1635 = vmatpush1.msra.mxu0 0.0
        %1636 = vmatprep.subr.mxu0 0.0
        %1637 = vmatpush1.msra.mxu0 0.0
        %1638 = vmatprep.subr.mxu0 0.0
        %1639 = vmatpush1.msra.mxu0 0.0
        %1640 = vmatprep.subr.mxu0 0.0
        %1641 = vmatpush1.msra.mxu0 0.0
        %1642 = vmatprep.subr.mxu0 0.0
        %1643 = vmatpush1.msra.mxu0 0.0
        %1644 = vmatprep.subr.mxu0 0.0
        %1645 = vmatpush1.msra.mxu0 0.0
        %1646 = vmatprep.subr.mxu0 0.0
        %1647 = vmatpush1.msra.mxu0 0.0
        %1648 = vmatprep.subr.mxu0 0.0
        %1649 = vmatpush1.msra.mxu0 0.0
        %1650 = vmatprep.subr.mxu0 0.0
        %1651 = vmatpush1.msra.mxu0 0.0
        %1652 = vmatprep.subr.mxu0 0.0
        %1653 = vmatpush1.msra.mxu0 0.0
        %1654 = vmatprep.subr.mxu0 0.0
        %1655 = vmatpush1.msra.mxu0 0.0
        %1656 = vmatprep.subr.mxu0 0.0
        %1657 = vmatpush1.msra.mxu0 0.0
        %1658 = vmatprep.subr.mxu0 0.0
        %1659 = vmatpush1.msra.mxu0 0.0
        %1660 = vmatprep.subr.mxu0 0.0
        %1661 = vmatpush1.msra.mxu0 0.0
        %1662 = vmatprep.subr.mxu0 0.0
        %1663 = vmatpush1.msra.mxu0 0.0
        %1664 = vmatprep.subr.mxu0 0.0
        %1665 = vmatpush1.msra.mxu0 0.0
        %1666 = vmatprep.subr.mxu0 0.0
        %1667 = vmatpush1.msra.mxu0 0.0
        %1668 = vmatprep.subr.mxu0 0.0
        %1669 = vmatpush1.msra.mxu0 0.0
        %1670 = vmatprep.subr.mxu0 0.0
        %1671 = vmatpush1.msra.mxu0 0.0
        %1672 = vmatprep.subr.mxu0 0.0
        %1673 = vmatpush1.msra.mxu0 0.0
        %1674 = vmatprep.subr.mxu0 0.0
        %1675 = vmatpush1.msra.mxu0 0.0
        %1676 = vmatprep.subr.mxu0 0.0
        %1677 = vmatpush1.msra.mxu0 0.0
        %1678 = vmatprep.mubr.f32.mxu0 0.0
        %1679 = vmatmul.mubr.f32.gmra.mrb[0].mxu0 %v1612
        %v1680 = vpop.f32.mrb[0].mxu0
        %v1681 = vadd.f32 %v509, %v1680
        %v1682 = vpop.f32.mrb[0].mxu0
        %1683 = vdwg.mxu0
        %v1684 = vmax.f32 %v1681, 0.0
        %v1686 = vsel %vm529, %v1684, 0
        %1688 = vmatprep.subr.mxu0 0.0
        %1689 = vmatpush1.msra.mxu0 %v500
        %1690 = vmatprep.subr.mxu0 0.0
        %1691 = vmatpush1.msra.mxu0 %v501
        %1692 = vmatprep.subr.mxu0 0.0
        %1693 = vmatpush1.msra.mxu0 %v502
        %1694 = vmatprep.subr.mxu0 0.0
        %1695 = vmatpush1.msra.mxu0 %v503
        %1696 = vmatprep.subr.mxu0 0.0
        %1697 = vmatpush1.msra.mxu0 0.0
        %1698 = vmatprep.subr.mxu0 0.0
        %1699 = vmatpush1.msra.mxu0 0.0
        %1700 = vmatprep.subr.mxu0 0.0
        %1701 = vmatpush1.msra.mxu0 0.0
        %1702 = vmatprep.subr.mxu0 0.0
        %1703 = vmatpush1.msra.mxu0 0.0
        %1704 = vmatprep.subr.mxu0 0.0
        %1705 = vmatpush1.msra.mxu0 0.0
        %1706 = vmatprep.subr.mxu0 0.0
        %1707 = vmatpush1.msra.mxu0 0.0
        %1708 = vmatprep.subr.mxu0 0.0
        %1709 = vmatpush1.msra.mxu0 0.0
        %1710 = vmatprep.subr.mxu0 0.0
        %1711 = vmatpush1.msra.mxu0 0.0
        %1712 = vmatprep.subr.mxu0 0.0
        %1713 = vmatpush1.msra.mxu0 0.0
        %1714 = vmatprep.subr.mxu0 0.0
        %1715 = vmatpush1.msra.mxu0 0.0
        %1716 = vmatprep.subr.mxu0 0.0
        %1717 = vmatpush1.msra.mxu0 0.0
        %1718 = vmatprep.subr.mxu0 0.0
        %1719 = vmatpush1.msra.mxu0 0.0
        %1720 = vmatprep.subr.mxu0 0.0
        %1721 = vmatpush1.msra.mxu0 0.0
        %1722 = vmatprep.subr.mxu0 0.0
        %1723 = vmatpush1.msra.mxu0 0.0
        %1724 = vmatprep.subr.mxu0 0.0
        %1725 = vmatpush1.msra.mxu0 0.0
        %1726 = vmatprep.subr.mxu0 0.0
        %1727 = vmatpush1.msra.mxu0 0.0
        %1728 = vmatprep.subr.mxu0 0.0
        %1729 = vmatpush1.msra.mxu0 0.0
        %1730 = vmatprep.subr.mxu0 0.0
        %1731 = vmatpush1.msra.mxu0 0.0
        %1732 = vmatprep.subr.mxu0 0.0
        %1733 = vmatpush1.msra.mxu0 0.0
        %1734 = vmatprep.subr.mxu0 0.0
        %1735 = vmatpush1.msra.mxu0 0.0
        %1736 = vmatprep.subr.mxu0 0.0
        %1737 = vmatpush1.msra.mxu0 0.0
        %1738 = vmatprep.subr.mxu0 0.0
        %1739 = vmatpush1.msra.mxu0 0.0
        %1740 = vmatprep.subr.mxu0 0.0
        %1741 = vmatpush1.msra.mxu0 0.0
        %1742 = vmatprep.subr.mxu0 0.0
        %1743 = vmatpush1.msra.mxu0 0.0
        %1744 = vmatprep.subr.mxu0 0.0
        %1745 = vmatpush1.msra.mxu0 0.0
        %1746 = vmatprep.subr.mxu0 0.0
        %1747 = vmatpush1.msra.mxu0 0.0
        %1748 = vmatprep.subr.mxu0 0.0
        %1749 = vmatpush1.msra.mxu0 0.0
        %1750 = vmatprep.subr.mxu0 0.0
        %1751 = vmatpush1.msra.mxu0 0.0
        %1752 = vmatprep.mubr.f32.mxu0 0.0
        %1753 = vmatmul.mubr.f32.gmra.mrb[0].mxu0 %v1686
        %v1754 = vpop.f32.mrb[0].mxu0
        %v1755 = vadd.f32 %v516, %v1754
        %v1756 = vpop.f32.mrb[0].mxu0
        %1757 = vdwg.mxu0
        %s1758 = scalar_lea.vmem %s494, 8
        %1759 = vst.msk [vmem:[%s1758] sm:$0x3] %vm751, %v1755
        %1761 = vrot.lane.b32.xlu0 %v1755, 32
        %v1762 = vpop.permute.xlu0 %1761
        %v1764 = vsel %vm529, %v1684, %v1762
        %v1766 = vsel %vm844, %v1764, 0
        %1768 = vmatprep.subr.mxu0 0.0
        %1769 = vmatpush1.msra.mxu0 %v834
        %1770 = vmatprep.subr.mxu0 0.0
        %1771 = vmatpush1.msra.mxu0 %v835
        %1772 = vmatprep.subr.mxu0 0.0
        %1773 = vmatpush1.msra.mxu0 %v836
        %1774 = vmatprep.subr.mxu0 0.0
        %1775 = vmatpush1.msra.mxu0 %v837
        %1776 = vmatprep.subr.mxu0 0.0
        %1777 = vmatpush1.msra.mxu0 %v850
        %1778 = vmatprep.subr.mxu0 0.0
        %1779 = vmatpush1.msra.mxu0 0.0
        %1780 = vmatprep.subr.mxu0 0.0
        %1781 = vmatpush1.msra.mxu0 0.0
        %1782 = vmatprep.subr.mxu0 0.0
        %1783 = vmatpush1.msra.mxu0 0.0
        %1784 = vmatprep.subr.mxu0 0.0
        %1785 = vmatpush1.msra.mxu0 0.0
        %1786 = vmatprep.subr.mxu0 0.0
        %1787 = vmatpush1.msra.mxu0 0.0
        %1788 = vmatprep.subr.mxu0 0.0
        %1789 = vmatpush1.msra.mxu0 0.0
        %1790 = vmatprep.subr.mxu0 0.0
        %1791 = vmatpush1.msra.mxu0 0.0
        %1792 = vmatprep.subr.mxu0 0.0
        %1793 = vmatpush1.msra.mxu0 0.0
        %1794 = vmatprep.subr.mxu0 0.0
        %1795 = vmatpush1.msra.mxu0 0.0
        %1796 = vmatprep.subr.mxu0 0.0
        %1797 = vmatpush1.msra.mxu0 0.0
        %1798 = vmatprep.subr.mxu0 0.0
        %1799 = vmatpush1.msra.mxu0 0.0
        %1800 = vmatprep.subr.mxu0 0.0
        %1801 = vmatpush1.msra.mxu0 0.0
        %1802 = vmatprep.subr.mxu0 0.0
        %1803 = vmatpush1.msra.mxu0 0.0
        %1804 = vmatprep.subr.mxu0 0.0
        %1805 = vmatpush1.msra.mxu0 0.0
        %1806 = vmatprep.subr.mxu0 0.0
        %1807 = vmatpush1.msra.mxu0 0.0
        %1808 = vmatprep.subr.mxu0 0.0
        %1809 = vmatpush1.msra.mxu0 0.0
        %1810 = vmatprep.subr.mxu0 0.0
        %1811 = vmatpush1.msra.mxu0 0.0
        %1812 = vmatprep.subr.mxu0 0.0
        %1813 = vmatpush1.msra.mxu0 0.0
        %1814 = vmatprep.subr.mxu0 0.0
        %1815 = vmatpush1.msra.mxu0 0.0
        %1816 = vmatprep.subr.mxu0 0.0
        %1817 = vmatpush1.msra.mxu0 0.0
        %1818 = vmatprep.subr.mxu0 0.0
        %1819 = vmatpush1.msra.mxu0 0.0
        %1820 = vmatprep.subr.mxu0 0.0
        %1821 = vmatpush1.msra.mxu0 0.0
        %1822 = vmatprep.subr.mxu0 0.0
        %1823 = vmatpush1.msra.mxu0 0.0
        %1824 = vmatprep.subr.mxu0 0.0
        %1825 = vmatpush1.msra.mxu0 0.0
        %1826 = vmatprep.subr.mxu0 0.0
        %1827 = vmatpush1.msra.mxu0 0.0
        %1828 = vmatprep.subr.mxu0 0.0
        %1829 = vmatpush1.msra.mxu0 0.0
        %1830 = vmatprep.subr.mxu0 0.0
        %1831 = vmatpush1.msra.mxu0 0.0
        %1832 = vmatprep.mubr.f32.mxu0 0.0
        %1833 = vmatmul.mubr.f32.gmra.mrb[0].mxu0 %v1766
        %v1834 = vpop.f32.mrb[0].mxu0
        %v1835 = vadd.f32 0.0, %v1834
        %v1836 = vpop.f32.mrb[0].mxu0
        %1837 = vdwg.mxu0
        %v1838 = vadd.f32 %v831, %v1835
        %v1839 = vmax.f32 %v1838, 0.0
        %v1841 = vsel %vm529, %v1839, 0
        %1843 = vmatprep.subr.mxu0 0.0
        %1844 = vmatpush1.msra.mxu0 %v496
        %1845 = vmatprep.subr.mxu0 0.0
        %1846 = vmatpush1.msra.mxu0 %v497
        %1847 = vmatprep.subr.mxu0 0.0
        %1848 = vmatpush1.msra.mxu0 %v498
        %1849 = vmatprep.subr.mxu0 0.0
        %1850 = vmatpush1.msra.mxu0 %v499
        %1851 = vmatprep.subr.mxu0 0.0
        %1852 = vmatpush1.msra.mxu0 0.0
        %1853 = vmatprep.subr.mxu0 0.0
        %1854 = vmatpush1.msra.mxu0 0.0
        %1855 = vmatprep.subr.mxu0 0.0
        %1856 = vmatpush1.msra.mxu0 0.0
        %1857 = vmatprep.subr.mxu0 0.0
        %1858 = vmatpush1.msra.mxu0 0.0
        %1859 = vmatprep.subr.mxu0 0.0
        %1860 = vmatpush1.msra.mxu0 0.0
        %1861 = vmatprep.subr.mxu0 0.0
        %1862 = vmatpush1.msra.mxu0 0.0
        %1863 = vmatprep.subr.mxu0 0.0
        %1864 = vmatpush1.msra.mxu0 0.0
        %1865 = vmatprep.subr.mxu0 0.0
        %1866 = vmatpush1.msra.mxu0 0.0
        %1867 = vmatprep.subr.mxu0 0.0
        %1868 = vmatpush1.msra.mxu0 0.0
        %1869 = vmatprep.subr.mxu0 0.0
        %1870 = vmatpush1.msra.mxu0 0.0
        %1871 = vmatprep.subr.mxu0 0.0
        %1872 = vmatpush1.msra.mxu0 0.0
        %1873 = vmatprep.subr.mxu0 0.0
        %1874 = vmatpush1.msra.mxu0 0.0
        %1875 = vmatprep.subr.mxu0 0.0
        %1876 = vmatpush1.msra.mxu0 0.0
        %1877 = vmatprep.subr.mxu0 0.0
        %1878 = vmatpush1.msra.mxu0 0.0
        %1879 = vmatprep.subr.mxu0 0.0
        %1880 = vmatpush1.msra.mxu0 0.0
        %1881 = vmatprep.subr.mxu0 0.0
        %1882 = vmatpush1.msra.mxu0 0.0
        %1883 = vmatprep.subr.mxu0 0.0
        %1884 = vmatpush1.msra.mxu0 0.0
        %1885 = vmatprep.subr.mxu0 0.0
        %1886 = vmatpush1.msra.mxu0 0.0
        %1887 = vmatprep.subr.mxu0 0.0
        %1888 = vmatpush1.msra.mxu0 0.0
        %1889 = vmatprep.subr.mxu0 0.0
        %1890 = vmatpush1.msra.mxu0 0.0
        %1891 = vmatprep.subr.mxu0 0.0
        %1892 = vmatpush1.msra.mxu0 0.0
        %1893 = vmatprep.subr.mxu0 0.0
        %1894 = vmatpush1.msra.mxu0 0.0
        %1895 = vmatprep.subr.mxu0 0.0
        %1896 = vmatpush1.msra.mxu0 0.0
        %1897 = vmatprep.subr.mxu0 0.0
        %1898 = vmatpush1.msra.mxu0 0.0
        %1899 = vmatprep.subr.mxu0 0.0
        %1900 = vmatpush1.msra.mxu0 0.0
        %1901 = vmatprep.subr.mxu0 0.0
        %1902 = vmatpush1.msra.mxu0 0.0
        %1903 = vmatprep.subr.mxu0 0.0
        %1904 = vmatpush1.msra.mxu0 0.0
        %1905 = vmatprep.subr.mxu0 0.0
        %1906 = vmatpush1.msra.mxu0 0.0
        %1907 = vmatprep.mubr.f32.mxu0 0.0
        %1908 = vmatmul.mubr.f32.gmra.mrb[0].mxu0 %v1841
        %v1909 = vpop.f32.mrb[0].mxu0
        %v1910 = vadd.f32 %v509, %v1909
        %v1911 = vpop.f32.mrb[0].mxu0
        %1912 = vdwg.mxu0
        %v1913 = vmax.f32 %v1910, 0.0
        %v1915 = vsel %vm529, %v1913, 0
        %1917 = vmatprep.subr.mxu0 0.0
        %1918 = vmatpush1.msra.mxu0 %v500
        %1919 = vmatprep.subr.mxu0 0.0
        %1920 = vmatpush1.msra.mxu0 %v501
        %1921 = vmatprep.subr.mxu0 0.0
        %1922 = vmatpush1.msra.mxu0 %v502
        %1923 = vmatprep.subr.mxu0 0.0
        %1924 = vmatpush1.msra.mxu0 %v503
        %1925 = vmatprep.subr.mxu0 0.0
        %1926 = vmatpush1.msra.mxu0 0.0
        %1927 = vmatprep.subr.mxu0 0.0
        %1928 = vmatpush1.msra.mxu0 0.0
        %1929 = vmatprep.subr.mxu0 0.0
        %1930 = vmatpush1.msra.mxu0 0.0
        %1931 = vmatprep.subr.mxu0 0.0
        %1932 = vmatpush1.msra.mxu0 0.0
        %1933 = vmatprep.subr.mxu0 0.0
        %1934 = vmatpush1.msra.mxu0 0.0
        %1935 = vmatprep.subr.mxu0 0.0
        %1936 = vmatpush1.msra.mxu0 0.0
        %1937 = vmatprep.subr.mxu0 0.0
        %1938 = vmatpush1.msra.mxu0 0.0
        %1939 = vmatprep.subr.mxu0 0.0
        %1940 = vmatpush1.msra.mxu0 0.0
        %1941 = vmatprep.subr.mxu0 0.0
        %1942 = vmatpush1.msra.mxu0 0.0
        %1943 = vmatprep.subr.mxu0 0.0
        %1944 = vmatpush1.msra.mxu0 0.0
        %1945 = vmatprep.subr.mxu0 0.0
        %1946 = vmatpush1.msra.mxu0 0.0
        %1947 = vmatprep.subr.mxu0 0.0
        %1948 = vmatpush1.msra.mxu0 0.0
        %1949 = vmatprep.subr.mxu0 0.0
        %1950 = vmatpush1.msra.mxu0 0.0
        %1951 = vmatprep.subr.mxu0 0.0
        %1952 = vmatpush1.msra.mxu0 0.0
        %1953 = vmatprep.subr.mxu0 0.0
        %1954 = vmatpush1.msra.mxu0 0.0
        %1955 = vmatprep.subr.mxu0 0.0
        %1956 = vmatpush1.msra.mxu0 0.0
        %1957 = vmatprep.subr.mxu0 0.0
        %1958 = vmatpush1.msra.mxu0 0.0
        %1959 = vmatprep.subr.mxu0 0.0
        %1960 = vmatpush1.msra.mxu0 0.0
        %1961 = vmatprep.subr.mxu0 0.0
        %1962 = vmatpush1.msra.mxu0 0.0
        %1963 = vmatprep.subr.mxu0 0.0
        %1964 = vmatpush1.msra.mxu0 0.0
        %1965 = vmatprep.subr.mxu0 0.0
        %1966 = vmatpush1.msra.mxu0 0.0
        %1967 = vmatprep.subr.mxu0 0.0
        %1968 = vmatpush1.msra.mxu0 0.0
        %1969 = vmatprep.subr.mxu0 0.0
        %1970 = vmatpush1.msra.mxu0 0.0
        %1971 = vmatprep.subr.mxu0 0.0
        %1972 = vmatpush1.msra.mxu0 0.0
        %1973 = vmatprep.subr.mxu0 0.0
        %1974 = vmatpush1.msra.mxu0 0.0
        %1975 = vmatprep.subr.mxu0 0.0
        %1976 = vmatpush1.msra.mxu0 0.0
        %1977 = vmatprep.subr.mxu0 0.0
        %1978 = vmatpush1.msra.mxu0 0.0
        %1979 = vmatprep.subr.mxu0 0.0
        %1980 = vmatpush1.msra.mxu0 0.0
        %1981 = vmatprep.mubr.f32.mxu0 0.0
        %1982 = vmatmul.mubr.f32.gmra.mrb[0].mxu0 %v1915
        %v1983 = vpop.f32.mrb[0].mxu0
        %v1984 = vadd.f32 %v516, %v1983
        %v1985 = vpop.f32.mrb[0].mxu0
        %1986 = vdwg.mxu0
        %s1987 = scalar_lea.vmem %s494, 10
        %1988 = vst.msk [vmem:[%s1987] sm:$0x3] %vm751, %v1984
        %1990 = vrot.lane.b32.xlu0 %v1984, 32
        %v1991 = vpop.permute.xlu0 %1990
        %v1993 = vsel %vm529, %v1913, %v1991
        %v1995 = vsel %vm844, %v1993, 0
        %1997 = vmatprep.subr.mxu0 0.0
        %1998 = vmatpush1.msra.mxu0 %v834
        %1999 = vmatprep.subr.mxu0 0.0
        %2000 = vmatpush1.msra.mxu0 %v835
        %2001 = vmatprep.subr.mxu0 0.0
        %2002 = vmatpush1.msra.mxu0 %v836
        %2003 = vmatprep.subr.mxu0 0.0
        %2004 = vmatpush1.msra.mxu0 %v837
        %2005 = vmatprep.subr.mxu0 0.0
        %2006 = vmatpush1.msra.mxu0 %v850
        %2007 = vmatprep.subr.mxu0 0.0
        %2008 = vmatpush1.msra.mxu0 0.0
        %2009 = vmatprep.subr.mxu0 0.0
        %2010 = vmatpush1.msra.mxu0 0.0
        %2011 = vmatprep.subr.mxu0 0.0
        %2012 = vmatpush1.msra.mxu0 0.0
        %2013 = vmatprep.subr.mxu0 0.0
        %2014 = vmatpush1.msra.mxu0 0.0
        %2015 = vmatprep.subr.mxu0 0.0
        %2016 = vmatpush1.msra.mxu0 0.0
        %2017 = vmatprep.subr.mxu0 0.0
        %2018 = vmatpush1.msra.mxu0 0.0
        %2019 = vmatprep.subr.mxu0 0.0
        %2020 = vmatpush1.msra.mxu0 0.0
        %2021 = vmatprep.subr.mxu0 0.0
        %2022 = vmatpush1.msra.mxu0 0.0
        %2023 = vmatprep.subr.mxu0 0.0
        %2024 = vmatpush1.msra.mxu0 0.0
        %2025 = vmatprep.subr.mxu0 0.0
        %2026 = vmatpush1.msra.mxu0 0.0
        %2027 = vmatprep.subr.mxu0 0.0
        %2028 = vmatpush1.msra.mxu0 0.0
        %2029 = vmatprep.subr.mxu0 0.0
        %2030 = vmatpush1.msra.mxu0 0.0
        %2031 = vmatprep.subr.mxu0 0.0
        %2032 = vmatpush1.msra.mxu0 0.0
        %2033 = vmatprep.subr.mxu0 0.0
        %2034 = vmatpush1.msra.mxu0 0.0
        %2035 = vmatprep.subr.mxu0 0.0
        %2036 = vmatpush1.msra.mxu0 0.0
        %2037 = vmatprep.subr.mxu0 0.0
        %2038 = vmatpush1.msra.mxu0 0.0
        %2039 = vmatprep.subr.mxu0 0.0
        %2040 = vmatpush1.msra.mxu0 0.0
        %2041 = vmatprep.subr.mxu0 0.0
        %2042 = vmatpush1.msra.mxu0 0.0
        %2043 = vmatprep.subr.mxu0 0.0
        %2044 = vmatpush1.msra.mxu0 0.0
        %2045 = vmatprep.subr.mxu0 0.0
        %2046 = vmatpush1.msra.mxu0 0.0
        %2047 = vmatprep.subr.mxu0 0.0
        %2048 = vmatpush1.msra.mxu0 0.0
        %2049 = vmatprep.subr.mxu0 0.0
        %2050 = vmatpush1.msra.mxu0 0.0
        %2051 = vmatprep.subr.mxu0 0.0
        %2052 = vmatpush1.msra.mxu0 0.0
        %2053 = vmatprep.subr.mxu0 0.0
        %2054 = vmatpush1.msra.mxu0 0.0
        %2055 = vmatprep.subr.mxu0 0.0
        %2056 = vmatpush1.msra.mxu0 0.0
        %2057 = vmatprep.subr.mxu0 0.0
        %2058 = vmatpush1.msra.mxu0 0.0
        %2059 = vmatprep.subr.mxu0 0.0
        %2060 = vmatpush1.msra.mxu0 0.0
        %2061 = vmatprep.mubr.f32.mxu0 0.0
        %2062 = vmatmul.mubr.f32.gmra.mrb[0].mxu0 %v1995
        %v2063 = vpop.f32.mrb[0].mxu0
        %v2064 = vadd.f32 0.0, %v2063
        %v2065 = vpop.f32.mrb[0].mxu0
        %2066 = vdwg.mxu0
        %v2067 = vadd.f32 %v831, %v2064
        %v2068 = vmax.f32 %v2067, 0.0
        %v2070 = vsel %vm529, %v2068, 0
        %2072 = vmatprep.subr.mxu0 0.0
        %2073 = vmatpush1.msra.mxu0 %v496
        %2074 = vmatprep.subr.mxu0 0.0
        %2075 = vmatpush1.msra.mxu0 %v497
        %2076 = vmatprep.subr.mxu0 0.0
        %2077 = vmatpush1.msra.mxu0 %v498
        %2078 = vmatprep.subr.mxu0 0.0
        %2079 = vmatpush1.msra.mxu0 %v499
        %2080 = vmatprep.subr.mxu0 0.0
        %2081 = vmatpush1.msra.mxu0 0.0
        %2082 = vmatprep.subr.mxu0 0.0
        %2083 = vmatpush1.msra.mxu0 0.0
        %2084 = vmatprep.subr.mxu0 0.0
        %2085 = vmatpush1.msra.mxu0 0.0
        %2086 = vmatprep.subr.mxu0 0.0
        %2087 = vmatpush1.msra.mxu0 0.0
        %2088 = vmatprep.subr.mxu0 0.0
        %2089 = vmatpush1.msra.mxu0 0.0
        %2090 = vmatprep.subr.mxu0 0.0
        %2091 = vmatpush1.msra.mxu0 0.0
        %2092 = vmatprep.subr.mxu0 0.0
        %2093 = vmatpush1.msra.mxu0 0.0
        %2094 = vmatprep.subr.mxu0 0.0
        %2095 = vmatpush1.msra.mxu0 0.0
        %2096 = vmatprep.subr.mxu0 0.0
        %2097 = vmatpush1.msra.mxu0 0.0
        %2098 = vmatprep.subr.mxu0 0.0
        %2099 = vmatpush1.msra.mxu0 0.0
        %2100 = vmatprep.subr.mxu0 0.0
        %2101 = vmatpush1.msra.mxu0 0.0
        %2102 = vmatprep.subr.mxu0 0.0
        %2103 = vmatpush1.msra.mxu0 0.0
        %2104 = vmatprep.subr.mxu0 0.0
        %2105 = vmatpush1.msra.mxu0 0.0
        %2106 = vmatprep.subr.mxu0 0.0
        %2107 = vmatpush1.msra.mxu0 0.0
        %2108 = vmatprep.subr.mxu0 0.0
        %2109 = vmatpush1.msra.mxu0 0.0
        %2110 = vmatprep.subr.mxu0 0.0
        %2111 = vmatpush1.msra.mxu0 0.0
        %2112 = vmatprep.subr.mxu0 0.0
        %2113 = vmatpush1.msra.mxu0 0.0
        %2114 = vmatprep.subr.mxu0 0.0
        %2115 = vmatpush1.msra.mxu0 0.0
        %2116 = vmatprep.subr.mxu0 0.0
        %2117 = vmatpush1.msra.mxu0 0.0
        %2118 = vmatprep.subr.mxu0 0.0
        %2119 = vmatpush1.msra.mxu0 0.0
        %2120 = vmatprep.subr.mxu0 0.0
        %2121 = vmatpush1.msra.mxu0 0.0
        %2122 = vmatprep.subr.mxu0 0.0
        %2123 = vmatpush1.msra.mxu0 0.0
        %2124 = vmatprep.subr.mxu0 0.0
        %2125 = vmatpush1.msra.mxu0 0.0
        %2126 = vmatprep.subr.mxu0 0.0
        %2127 = vmatpush1.msra.mxu0 0.0
        %2128 = vmatprep.subr.mxu0 0.0
        %2129 = vmatpush1.msra.mxu0 0.0
        %2130 = vmatprep.subr.mxu0 0.0
        %2131 = vmatpush1.msra.mxu0 0.0
        %2132 = vmatprep.subr.mxu0 0.0
        %2133 = vmatpush1.msra.mxu0 0.0
        %2134 = vmatprep.subr.mxu0 0.0
        %2135 = vmatpush1.msra.mxu0 0.0
        %2136 = vmatprep.mubr.f32.mxu0 0.0
        %2137 = vmatmul.mubr.f32.gmra.mrb[0].mxu0 %v2070
        %v2138 = vpop.f32.mrb[0].mxu0
        %v2139 = vadd.f32 %v509, %v2138
        %v2140 = vpop.f32.mrb[0].mxu0
        %2141 = vdwg.mxu0
        %v2142 = vmax.f32 %v2139, 0.0
        %v2144 = vsel %vm529, %v2142, 0
        %2146 = vmatprep.subr.mxu0 0.0
        %2147 = vmatpush1.msra.mxu0 %v500
        %2148 = vmatprep.subr.mxu0 0.0
        %2149 = vmatpush1.msra.mxu0 %v501
        %2150 = vmatprep.subr.mxu0 0.0
        %2151 = vmatpush1.msra.mxu0 %v502
        %2152 = vmatprep.subr.mxu0 0.0
        %2153 = vmatpush1.msra.mxu0 %v503
        %2154 = vmatprep.subr.mxu0 0.0
        %2155 = vmatpush1.msra.mxu0 0.0
        %2156 = vmatprep.subr.mxu0 0.0
        %2157 = vmatpush1.msra.mxu0 0.0
        %2158 = vmatprep.subr.mxu0 0.0
        %2159 = vmatpush1.msra.mxu0 0.0
        %2160 = vmatprep.subr.mxu0 0.0
        %2161 = vmatpush1.msra.mxu0 0.0
        %2162 = vmatprep.subr.mxu0 0.0
        %2163 = vmatpush1.msra.mxu0 0.0
        %2164 = vmatprep.subr.mxu0 0.0
        %2165 = vmatpush1.msra.mxu0 0.0
        %2166 = vmatprep.subr.mxu0 0.0
        %2167 = vmatpush1.msra.mxu0 0.0
        %2168 = vmatprep.subr.mxu0 0.0
        %2169 = vmatpush1.msra.mxu0 0.0
        %2170 = vmatprep.subr.mxu0 0.0
        %2171 = vmatpush1.msra.mxu0 0.0
        %2172 = vmatprep.subr.mxu0 0.0
        %2173 = vmatpush1.msra.mxu0 0.0
        %2174 = vmatprep.subr.mxu0 0.0
        %2175 = vmatpush1.msra.mxu0 0.0
        %2176 = vmatprep.subr.mxu0 0.0
        %2177 = vmatpush1.msra.mxu0 0.0
        %2178 = vmatprep.subr.mxu0 0.0
        %2179 = vmatpush1.msra.mxu0 0.0
        %2180 = vmatprep.subr.mxu0 0.0
        %2181 = vmatpush1.msra.mxu0 0.0
        %2182 = vmatprep.subr.mxu0 0.0
        %2183 = vmatpush1.msra.mxu0 0.0
        %2184 = vmatprep.subr.mxu0 0.0
        %2185 = vmatpush1.msra.mxu0 0.0
        %2186 = vmatprep.subr.mxu0 0.0
        %2187 = vmatpush1.msra.mxu0 0.0
        %2188 = vmatprep.subr.mxu0 0.0
        %2189 = vmatpush1.msra.mxu0 0.0
        %2190 = vmatprep.subr.mxu0 0.0
        %2191 = vmatpush1.msra.mxu0 0.0
        %2192 = vmatprep.subr.mxu0 0.0
        %2193 = vmatpush1.msra.mxu0 0.0
        %2194 = vmatprep.subr.mxu0 0.0
        %2195 = vmatpush1.msra.mxu0 0.0
        %2196 = vmatprep.subr.mxu0 0.0
        %2197 = vmatpush1.msra.mxu0 0.0
        %2198 = vmatprep.subr.mxu0 0.0
        %2199 = vmatpush1.msra.mxu0 0.0
        %2200 = vmatprep.subr.mxu0 0.0
        %2201 = vmatpush1.msra.mxu0 0.0
        %2202 = vmatprep.subr.mxu0 0.0
        %2203 = vmatpush1.msra.mxu0 0.0
        %2204 = vmatprep.subr.mxu0 0.0
        %2205 = vmatpush1.msra.mxu0 0.0
        %2206 = vmatprep.subr.mxu0 0.0
        %2207 = vmatpush1.msra.mxu0 0.0
        %2208 = vmatprep.subr.mxu0 0.0
        %2209 = vmatpush1.msra.mxu0 0.0
        %2210 = vmatprep.mubr.f32.mxu0 0.0
        %2211 = vmatmul.mubr.f32.gmra.mrb[0].mxu0 %v2144
        %v2212 = vpop.f32.mrb[0].mxu0
        %v2213 = vadd.f32 %v516, %v2212
        %v2214 = vpop.f32.mrb[0].mxu0
        %2215 = vdwg.mxu0
        %s2216 = scalar_lea.vmem %s494, 12
        %2217 = vst.msk [vmem:[%s2216] sm:$0x3] %vm751, %v2213
        %2219 = vrot.lane.b32.xlu0 %v2213, 32
        %v2220 = vpop.permute.xlu0 %2219
        %v2222 = vsel %vm529, %v2142, %v2220
        %v2224 = vsel %vm844, %v2222, 0
        %2226 = vmatprep.subr.mxu0 0.0
        %2227 = vmatpush1.msra.mxu0 %v834
        %2228 = vmatprep.subr.mxu0 0.0
        %2229 = vmatpush1.msra.mxu0 %v835
        %2230 = vmatprep.subr.mxu0 0.0
        %2231 = vmatpush1.msra.mxu0 %v836
        %2232 = vmatprep.subr.mxu0 0.0
        %2233 = vmatpush1.msra.mxu0 %v837
        %2234 = vmatprep.subr.mxu0 0.0
        %2235 = vmatpush1.msra.mxu0 %v850
        %2236 = vmatprep.subr.mxu0 0.0
        %2237 = vmatpush1.msra.mxu0 0.0
        %2238 = vmatprep.subr.mxu0 0.0
        %2239 = vmatpush1.msra.mxu0 0.0
        %2240 = vmatprep.subr.mxu0 0.0
        %2241 = vmatpush1.msra.mxu0 0.0
        %2242 = vmatprep.subr.mxu0 0.0
        %2243 = vmatpush1.msra.mxu0 0.0
        %2244 = vmatprep.subr.mxu0 0.0
        %2245 = vmatpush1.msra.mxu0 0.0
        %2246 = vmatprep.subr.mxu0 0.0
        %2247 = vmatpush1.msra.mxu0 0.0
        %2248 = vmatprep.subr.mxu0 0.0
        %2249 = vmatpush1.msra.mxu0 0.0
        %2250 = vmatprep.subr.mxu0 0.0
        %2251 = vmatpush1.msra.mxu0 0.0
        %2252 = vmatprep.subr.mxu0 0.0
        %2253 = vmatpush1.msra.mxu0 0.0
        %2254 = vmatprep.subr.mxu0 0.0
        %2255 = vmatpush1.msra.mxu0 0.0
        %2256 = vmatprep.subr.mxu0 0.0
        %2257 = vmatpush1.msra.mxu0 0.0
        %2258 = vmatprep.subr.mxu0 0.0
        %2259 = vmatpush1.msra.mxu0 0.0
        %2260 = vmatprep.subr.mxu0 0.0
        %2261 = vmatpush1.msra.mxu0 0.0
        %2262 = vmatprep.subr.mxu0 0.0
        %2263 = vmatpush1.msra.mxu0 0.0
        %2264 = vmatprep.subr.mxu0 0.0
        %2265 = vmatpush1.msra.mxu0 0.0
        %2266 = vmatprep.subr.mxu0 0.0
        %2267 = vmatpush1.msra.mxu0 0.0
        %2268 = vmatprep.subr.mxu0 0.0
        %2269 = vmatpush1.msra.mxu0 0.0
        %2270 = vmatprep.subr.mxu0 0.0
        %2271 = vmatpush1.msra.mxu0 0.0
        %2272 = vmatprep.subr.mxu0 0.0
        %2273 = vmatpush1.msra.mxu0 0.0
        %2274 = vmatprep.subr.mxu0 0.0
        %2275 = vmatpush1.msra.mxu0 0.0
        %2276 = vmatprep.subr.mxu0 0.0
        %2277 = vmatpush1.msra.mxu0 0.0
        %2278 = vmatprep.subr.mxu0 0.0
        %2279 = vmatpush1.msra.mxu0 0.0
        %2280 = vmatprep.subr.mxu0 0.0
        %2281 = vmatpush1.msra.mxu0 0.0
        %2282 = vmatprep.subr.mxu0 0.0
        %2283 = vmatpush1.msra.mxu0 0.0
        %2284 = vmatprep.subr.mxu0 0.0
        %2285 = vmatpush1.msra.mxu0 0.0
        %2286 = vmatprep.subr.mxu0 0.0
        %2287 = vmatpush1.msra.mxu0 0.0
        %2288 = vmatprep.subr.mxu0 0.0
        %2289 = vmatpush1.msra.mxu0 0.0
        %2290 = vmatprep.mubr.f32.mxu0 0.0
        %2291 = vmatmul.mubr.f32.gmra.mrb[0].mxu0 %v2224
        %v2292 = vpop.f32.mrb[0].mxu0
        %v2293 = vadd.f32 0.0, %v2292
        %v2294 = vpop.f32.mrb[0].mxu0
        %2295 = vdwg.mxu0
        %v2296 = vadd.f32 %v831, %v2293
        %v2297 = vmax.f32 %v2296, 0.0
        %v2299 = vsel %vm529, %v2297, 0
        %2301 = vmatprep.subr.mxu0 0.0
        %2302 = vmatpush1.msra.mxu0 %v496
        %2303 = vmatprep.subr.mxu0 0.0
        %2304 = vmatpush1.msra.mxu0 %v497
        %2305 = vmatprep.subr.mxu0 0.0
        %2306 = vmatpush1.msra.mxu0 %v498
        %2307 = vmatprep.subr.mxu0 0.0
        %2308 = vmatpush1.msra.mxu0 %v499
        %2309 = vmatprep.subr.mxu0 0.0
        %2310 = vmatpush1.msra.mxu0 0.0
        %2311 = vmatprep.subr.mxu0 0.0
        %2312 = vmatpush1.msra.mxu0 0.0
        %2313 = vmatprep.subr.mxu0 0.0
        %2314 = vmatpush1.msra.mxu0 0.0
        %2315 = vmatprep.subr.mxu0 0.0
        %2316 = vmatpush1.msra.mxu0 0.0
        %2317 = vmatprep.subr.mxu0 0.0
        %2318 = vmatpush1.msra.mxu0 0.0
        %2319 = vmatprep.subr.mxu0 0.0
        %2320 = vmatpush1.msra.mxu0 0.0
        %2321 = vmatprep.subr.mxu0 0.0
        %2322 = vmatpush1.msra.mxu0 0.0
        %2323 = vmatprep.subr.mxu0 0.0
        %2324 = vmatpush1.msra.mxu0 0.0
        %2325 = vmatprep.subr.mxu0 0.0
        %2326 = vmatpush1.msra.mxu0 0.0
        %2327 = vmatprep.subr.mxu0 0.0
        %2328 = vmatpush1.msra.mxu0 0.0
        %2329 = vmatprep.subr.mxu0 0.0
        %2330 = vmatpush1.msra.mxu0 0.0
        %2331 = vmatprep.subr.mxu0 0.0
        %2332 = vmatpush1.msra.mxu0 0.0
        %2333 = vmatprep.subr.mxu0 0.0
        %2334 = vmatpush1.msra.mxu0 0.0
        %2335 = vmatprep.subr.mxu0 0.0
        %2336 = vmatpush1.msra.mxu0 0.0
        %2337 = vmatprep.subr.mxu0 0.0
        %2338 = vmatpush1.msra.mxu0 0.0
        %2339 = vmatprep.subr.mxu0 0.0
        %2340 = vmatpush1.msra.mxu0 0.0
        %2341 = vmatprep.subr.mxu0 0.0
        %2342 = vmatpush1.msra.mxu0 0.0
        %2343 = vmatprep.subr.mxu0 0.0
        %2344 = vmatpush1.msra.mxu0 0.0
        %2345 = vmatprep.subr.mxu0 0.0
        %2346 = vmatpush1.msra.mxu0 0.0
        %2347 = vmatprep.subr.mxu0 0.0
        %2348 = vmatpush1.msra.mxu0 0.0
        %2349 = vmatprep.subr.mxu0 0.0
        %2350 = vmatpush1.msra.mxu0 0.0
        %2351 = vmatprep.subr.mxu0 0.0
        %2352 = vmatpush1.msra.mxu0 0.0
        %2353 = vmatprep.subr.mxu0 0.0
        %2354 = vmatpush1.msra.mxu0 0.0
        %2355 = vmatprep.subr.mxu0 0.0
        %2356 = vmatpush1.msra.mxu0 0.0
        %2357 = vmatprep.subr.mxu0 0.0
        %2358 = vmatpush1.msra.mxu0 0.0
        %2359 = vmatprep.subr.mxu0 0.0
        %2360 = vmatpush1.msra.mxu0 0.0
        %2361 = vmatprep.subr.mxu0 0.0
        %2362 = vmatpush1.msra.mxu0 0.0
        %2363 = vmatprep.subr.mxu0 0.0
        %2364 = vmatpush1.msra.mxu0 0.0
        %2365 = vmatprep.mubr.f32.mxu0 0.0
        %2366 = vmatmul.mubr.f32.gmra.mrb[0].mxu0 %v2299
        %v2367 = vpop.f32.mrb[0].mxu0
        %v2368 = vadd.f32 %v509, %v2367
        %v2369 = vpop.f32.mrb[0].mxu0
        %2370 = vdwg.mxu0
        %v2371 = vmax.f32 %v2368, 0.0
        %v2373 = vsel %vm529, %v2371, 0
        %2375 = vmatprep.subr.mxu0 0.0
        %2376 = vmatpush1.msra.mxu0 %v500
        %2377 = vmatprep.subr.mxu0 0.0
        %2378 = vmatpush1.msra.mxu0 %v501
        %2379 = vmatprep.subr.mxu0 0.0
        %2380 = vmatpush1.msra.mxu0 %v502
        %2381 = vmatprep.subr.mxu0 0.0
        %2382 = vmatpush1.msra.mxu0 %v503
        %2383 = vmatprep.subr.mxu0 0.0
        %2384 = vmatpush1.msra.mxu0 0.0
        %2385 = vmatprep.subr.mxu0 0.0
        %2386 = vmatpush1.msra.mxu0 0.0
        %2387 = vmatprep.subr.mxu0 0.0
        %2388 = vmatpush1.msra.mxu0 0.0
        %2389 = vmatprep.subr.mxu0 0.0
        %2390 = vmatpush1.msra.mxu0 0.0
        %2391 = vmatprep.subr.mxu0 0.0
        %2392 = vmatpush1.msra.mxu0 0.0
        %2393 = vmatprep.subr.mxu0 0.0
        %2394 = vmatpush1.msra.mxu0 0.0
        %2395 = vmatprep.subr.mxu0 0.0
        %2396 = vmatpush1.msra.mxu0 0.0
        %2397 = vmatprep.subr.mxu0 0.0
        %2398 = vmatpush1.msra.mxu0 0.0
        %2399 = vmatprep.subr.mxu0 0.0
        %2400 = vmatpush1.msra.mxu0 0.0
        %2401 = vmatprep.subr.mxu0 0.0
        %2402 = vmatpush1.msra.mxu0 0.0
        %2403 = vmatprep.subr.mxu0 0.0
        %2404 = vmatpush1.msra.mxu0 0.0
        %2405 = vmatprep.subr.mxu0 0.0
        %2406 = vmatpush1.msra.mxu0 0.0
        %2407 = vmatprep.subr.mxu0 0.0
        %2408 = vmatpush1.msra.mxu0 0.0
        %2409 = vmatprep.subr.mxu0 0.0
        %2410 = vmatpush1.msra.mxu0 0.0
        %2411 = vmatprep.subr.mxu0 0.0
        %2412 = vmatpush1.msra.mxu0 0.0
        %2413 = vmatprep.subr.mxu0 0.0
        %2414 = vmatpush1.msra.mxu0 0.0
        %2415 = vmatprep.subr.mxu0 0.0
        %2416 = vmatpush1.msra.mxu0 0.0
        %2417 = vmatprep.subr.mxu0 0.0
        %2418 = vmatpush1.msra.mxu0 0.0
        %2419 = vmatprep.subr.mxu0 0.0
        %2420 = vmatpush1.msra.mxu0 0.0
        %2421 = vmatprep.subr.mxu0 0.0
        %2422 = vmatpush1.msra.mxu0 0.0
        %2423 = vmatprep.subr.mxu0 0.0
        %2424 = vmatpush1.msra.mxu0 0.0
        %2425 = vmatprep.subr.mxu0 0.0
        %2426 = vmatpush1.msra.mxu0 0.0
        %2427 = vmatprep.subr.mxu0 0.0
        %2428 = vmatpush1.msra.mxu0 0.0
        %2429 = vmatprep.subr.mxu0 0.0
        %2430 = vmatpush1.msra.mxu0 0.0
        %2431 = vmatprep.subr.mxu0 0.0
        %2432 = vmatpush1.msra.mxu0 0.0
        %2433 = vmatprep.subr.mxu0 0.0
        %2434 = vmatpush1.msra.mxu0 0.0
        %2435 = vmatprep.subr.mxu0 0.0
        %2436 = vmatpush1.msra.mxu0 0.0
        %2437 = vmatprep.subr.mxu0 0.0
        %2438 = vmatpush1.msra.mxu0 0.0
        %2439 = vmatprep.mubr.f32.mxu0 0.0
        %2440 = vmatmul.mubr.f32.gmra.mrb[0].mxu0 %v2373
        %v2441 = vpop.f32.mrb[0].mxu0
        %v2442 = vadd.f32 %v516, %v2441
        %v2443 = vpop.f32.mrb[0].mxu0
        %2444 = vdwg.mxu0
        %s2445 = scalar_lea.vmem %s494, 14
        %2446 = vst.msk [vmem:[%s2445] sm:$0x3] %vm751, %v2442
        %p2447 = scmp.lt.s32.totalorder %s25, 1
        %s2448 = scalar_select %p2447, %s25, 1
        %s2449 = smul.addr %s2448, 8
        %s2450 = smul.addr %s2449, 2
        %s2451 = scalar_lea.vmem %s10, %s2450
        // Predicated region
        $region69: #{tpu_custom_call.1} parent=59 // pred_check
          %p2452 = pneg %p288
        $region70: #{tpu_custom_call.1} parent=59 // pred_check_branch
          %2454 = sbr.rel (%p2452) target = $region72
        $region71: #{tpu_custom_call.1} parent=59 // pred_region
          _
        $region72: #{tpu_custom_call.1} parent=59 // pred_fallthru
          _
      $region60: #{tpu_custom_call.1} parent=5 // pred_fallthru
        _
      %p2455 = scmp.le.s32.totalorder 2, %s20
      // Predicated region
      $region73: #{tpu_custom_call.1} parent=5 // pred_check
        %p2456 = pneg %p2455
      $region74: #{tpu_custom_call.1} parent=5 // pred_check_branch
        %2458 = sbr.rel (%p2456) target = $region76
      $region75: #{tpu_custom_call.1} parent=5 // pred_region
        %s2459 = ssub.s32 %s20, 2
        // Predicated region
        $region77: #{tpu_custom_call.1} parent=75 // pred_check
          %p2460 = pneg %p294
        $region78: #{tpu_custom_call.1} parent=75 // pred_check_branch
          %2462 = sbr.rel (%p2460) target = $region80
        $region79: #{tpu_custom_call.1} parent=75 // pred_region
          %p2463 = scmp.lt.s32.totalorder %s26, 1
          %s2464 = scalar_select %p2463, %s26, 1
          %s2465 = smul.addr %s2464, 8
          %s2466 = smul.addr %s2465, 2
          %s2467 = scalar_lea.vmem %s10, %s2466
        $region80: #{tpu_custom_call.1} parent=75 // pred_fallthru
          _
      $region76: #{tpu_custom_call.1} parent=5 // pred_fallthru
        _
    $region6: #{tpu_custom_call.1} parent=1 // loop_footer
      %s24 = sadd.s32 1, %s20
    $region7: #{tpu_custom_call.1} parent=1 // loop_footer_branch
      %19 = sbr.rel target = $region3
    $region8: #{tpu_custom_call.1} parent=1 // loop_exit
      _
    %2468 = vsyncpa [#allocation3], 1
    %s2469 = scalar_lea.sflag [#allocation3], 1
    %2470 = vsyncpa %s2469, 1
    %2471 = vsyncpa [#allocation5], 1
    %s2472 = scalar_lea.sflag [#allocation5], 1
    %2473 = vsyncpa %s2472, 1

</llo_original>
